<compile_context>
chip_gen: v7x
topology: tpu7x:2x2x1
jax: 0.10.0
libtpu: 0.0.40
codegen_flags: <defaults>
</compile_context>

<pallas_src>
import functools

import jax
import jax.numpy as jnp
from jax.experimental import pallas as pl
from jax.experimental.pallas import tpu as pltpu


def _projector_kernel(x_ref,
                      w1_ref, g1_ref, be1_ref,
                      w2_ref, g2_ref, be2_ref,
                      w3_ref, b3_ref,
                      out_ref,
                      h_buf, ssum, ssq, s_ref, t_ref,
                      *, n_rows, tm):
    eps = jnp.float32(1e-5)
    inv_n = jnp.float32(1.0 / n_rows)

    p = pl.program_id(0)          # phase: 0 -> layer1, 1 -> layer2, 2 -> layer3
    j = pl.program_id(1)          # batch row-tile index
    row = pl.ds(pl.multiple_of(j * tm, tm), tm)

    def bn_scale_shift(g, be):
        """Fold train-mode BN into a per-feature scale/shift from f32 stats."""
        mu = ssum[...] * inv_n
        var = jnp.maximum(ssq[...] * inv_n - mu * mu, 0.0)   # one-pass, biased
        s = g * jax.lax.rsqrt(var + eps)
        return s, be - mu * s

    def accumulate(h):
        ssum[...] += jnp.sum(h, axis=0, keepdims=True)
        ssq[...] += jnp.sum(h * h, axis=0, keepdims=True)

    # ---------------- phase 0: Linear1 (bias dropped - cancels in BN) --------
    @pl.when(p == 0)
    def _():
        @pl.when(j == 0)
        def _():
            ssum[...] = jnp.zeros_like(ssum)
            ssq[...] = jnp.zeros_like(ssq)
        h1 = jnp.dot(x_ref[...], w1_ref[...], preferred_element_type=jnp.float32)
        h_buf[row, :] = h1
        accumulate(h1)

    # ---------------- phase 1: BN1 + ReLU + Linear2 (bias dropped) -----------
    @pl.when(p == 1)
    def _():
        @pl.when(j == 0)
        def _():
            s, t = bn_scale_shift(g1_ref[...], be1_ref[...])
            s_ref[...] = s
            t_ref[...] = t
            ssum[...] = jnp.zeros_like(ssum)
            ssq[...] = jnp.zeros_like(ssq)
        a = jnp.maximum(h_buf[row, :] * s_ref[...] + t_ref[...], 0.0)
        h2 = jnp.dot(a.astype(jnp.bfloat16), w2_ref[...],
                     preferred_element_type=jnp.float32)
        h_buf[row, :] = h2
        accumulate(h2)

    # ---------------- phase 2: BN2 + ReLU + Linear3 (with bias) --------------
    @pl.when(p == 2)
    def _():
        @pl.when(j == 0)
        def _():
            s, t = bn_scale_shift(g2_ref[...], be2_ref[...])
            s_ref[...] = s
            t_ref[...] = t
        a = jnp.maximum(h_buf[row, :] * s_ref[...] + t_ref[...], 0.0)
        out = jnp.dot(a.astype(jnp.bfloat16), w3_ref[...],
                      preferred_element_type=jnp.float32) + b3_ref[...]
        out_ref[...] = out.astype(out_ref.dtype)


def _pick_row_tile(n):
    # Prefer MXU-native row tiles (256 on v6e/v7x, 128 on v5e), fall back to
    # smaller multiples of 8 for tiny batches.
    for t in (256, 128, 64, 32, 16, 8):
        if n % t == 0:
            return t
    raise ValueError("batch size must be a multiple of 8")


def _vmem_limit_bytes(n, d, p, tm):
    bf2, f4 = 2, 4
    need = (2 * tm * d * bf2                 # x tile, double-buffered (bf16)
            + (d * p + 2 * p * p) * bf2      # w1, w2, w3 resident (bf16)
            + 5 * p * f4                     # g1, be1, g2, be2, b3
            + 2 * tm * p * f4                # out tile, double-buffered
            + n * p * f4                     # h_buf scratch
            + 4 * p * f4)                    # ssum, ssq, s, t
    # headroom for compiler temporaries; keep under the v7x 64 MiB budget.
    return int(min(48 * 2**20, max(2 * need + (4 << 20), 16 * 2**20)))


def projector_forward(x, params, *, tm=None):
    """x: (N, D) float32.  params: dict from init_params.  Returns (N, P) f32."""
    N, D = x.shape
    P = params["w1"].shape[1]
    if tm is None:
        tm = _pick_row_tile(N)
    assert N % tm == 0 and tm % 8 == 0, "row tile must divide N and be a multiple of 8"
    assert P % 128 == 0, "proj_dim must be a multiple of 128 for lane-dense tiles"
    nt = N // tm

    kernel = functools.partial(_projector_kernel, n_rows=N, tm=tm)

    grid_spec = pltpu.PrefetchScalarGridSpec(
        num_scalar_prefetch=0,
        grid=(3, nt),
        in_specs=[
            # x: fetch row-tile j only during phase 0 (pinned afterwards).
            pl.BlockSpec((tm, D), lambda p, j: (jnp.where(p == 0, j, 0), 0)),
            pl.BlockSpec((D, P), lambda p, j: (0, 0)),   # w1 (resident)
            pl.BlockSpec((1, P), lambda p, j: (0, 0)),   # g1
            pl.BlockSpec((1, P), lambda p, j: (0, 0)),   # be1
            pl.BlockSpec((P, P), lambda p, j: (0, 0)),   # w2 (resident)
            pl.BlockSpec((1, P), lambda p, j: (0, 0)),   # g2
            pl.BlockSpec((1, P), lambda p, j: (0, 0)),   # be2
            pl.BlockSpec((P, P), lambda p, j: (0, 0)),   # w3 (resident)
            pl.BlockSpec((1, P), lambda p, j: (0, 0)),   # b3
        ],
        # output tile only advances in phase 2 -> exactly one writeback/tile.
        out_specs=pl.BlockSpec((tm, P), lambda p, j: (jnp.where(p == 2, j, 0), 0)),
        scratch_shapes=[
            pltpu.VMEM((N, P), jnp.float32),   # h_buf (layer intermediate)
            pltpu.VMEM((1, P), jnp.float32),   # per-feature sum
            pltpu.VMEM((1, P), jnp.float32),   # per-feature sum of squares
            pltpu.VMEM((1, P), jnp.float32),   # folded BN scale
            pltpu.VMEM((1, P), jnp.float32),   # folded BN shift
        ],
    )

    cost = pl.CostEstimate(
        flops=2 * N * (D * P + 2 * P * P),
        transcendentals=2 * P,
        bytes_accessed=(N * D * 2 + (D * P + 2 * P * P) * 2
                        + 5 * P * 4 + N * P * 4),
    )

    return pl.pallas_call(
        kernel,
        grid_spec=grid_spec,
        out_shape=jax.ShapeDtypeStruct((N, P), jnp.float32),
        compiler_params=pltpu.CompilerParams(
            dimension_semantics=("arbitrary", "arbitrary"),
            vmem_limit_bytes=_vmem_limit_bytes(N, D, P, tm),
        ),
        cost_estimate=cost,
    )(x.astype(jnp.bfloat16),
      params["w1"].astype(jnp.bfloat16), params["g1"], params["be1"],
      params["w2"].astype(jnp.bfloat16), params["g2"], params["be2"],
      params["w3"].astype(jnp.bfloat16), params["b3"])


def init_params(key, D, P):
    """Deterministic synthetic init (PyTorch-style uniform ranges, fresh BN)."""
    ks = jax.random.split(key, 6)

    def lin(kw, kb, fan_in, fan_out):
        bound = 1.0 / jnp.sqrt(jnp.float32(fan_in))
        w = jax.random.uniform(kw, (fan_in, fan_out), jnp.float32, -bound, bound)
        b = jax.random.uniform(kb, (1, fan_out), jnp.float32, -bound, bound)
        return w, b

    w1, b1 = lin(ks[0], ks[1], D, P)
    w2, b2 = lin(ks[2], ks[3], P, P)
    w3, b3 = lin(ks[4], ks[5], P, P)
    ones = jnp.ones((1, P), jnp.float32)
    zeros = jnp.zeros((1, P), jnp.float32)
    return dict(w1=w1, b1=b1, g1=ones, be1=zeros,
                w2=w2, b2=b2, g2=ones, be2=zeros,
                w3=w3, b3=b3)


def projector_reference(x, p):
    """Pure-JAX reference with PyTorch train-mode BN semantics.

    It keeps the (mathematically redundant) pre-BN linear biases and two-pass
    variance; matmuls use the same bf16-in / f32-accumulate precision as the
    kernel so the comparison tolerance can stay tight.
    """
    eps = jnp.float32(1e-5)
    bf = jnp.bfloat16

    def dot(a, w):
        return jnp.dot(a.astype(bf), w.astype(bf), preferred_element_type=jnp.float32)

    def bn_relu(h, g, be):
        mu = h.mean(0, keepdims=True)
        var = ((h - mu) ** 2).mean(0, keepdims=True)        # biased, train-mode
        return jnp.maximum((h - mu) * jax.lax.rsqrt(var + eps) * g + be, 0.0)

    h = bn_relu(dot(x, p["w1"]) + p["b1"], p["g1"], p["be1"])
    h = bn_relu(dot(h, p["w2"]) + p["b2"], p["g2"], p["be2"])
    return dot(h, p["w3"]) + p["b3"]


if __name__ == "__main__":
    # Small shapes consistent with the module: batch N, input dim D, proj_dim P.
    N, D, P = 128, 64, 256

    key = jax.random.PRNGKey(0)
    kx, kp = jax.random.split(key)
    x = jax.random.normal(kx, (N, D), jnp.float32)
    params = init_params(kp, D, P)

    # tm=32 -> 4 row tiles: exercises the tiled, two-pass-BN pipeline at small N.
    out = projector_forward(x, params, tm=32)
    out = jax.block_until_ready(out)

    ref = projector_reference(x, params)
    assert out.shape == (N, P)
    max_err = float(jnp.max(jnp.abs(out - ref)))
    assert jnp.allclose(out, ref, atol=1e-2, rtol=1e-2), (
        f"mismatch vs reference (max |err| = {max_err})")

    print("KERNEL_OK")
</pallas_src>

<mosaic_0001>
module attributes {stable_mosaic.version = 11 : i64} {
  func.func @_projector_kernel(%arg0: i32, %arg1: i32, %arg2: memref<32x64xbf16, #tpu.memory_space<vmem>>, %arg3: memref<64x256xbf16, #tpu.memory_space<vmem>>, %arg4: memref<1x256xf32, #tpu.memory_space<vmem>>, %arg5: memref<1x256xf32, #tpu.memory_space<vmem>>, %arg6: memref<256x256xbf16, #tpu.memory_space<vmem>>, %arg7: memref<1x256xf32, #tpu.memory_space<vmem>>, %arg8: memref<1x256xf32, #tpu.memory_space<vmem>>, %arg9: memref<256x256xbf16, #tpu.memory_space<vmem>>, %arg10: memref<1x256xf32, #tpu.memory_space<vmem>>, %arg11: memref<32x256xf32, #tpu.memory_space<vmem>>, %arg12: memref<128x256xf32, #tpu.memory_space<vmem>>, %arg13: memref<1x256xf32, #tpu.memory_space<vmem>>, %arg14: memref<1x256xf32, #tpu.memory_space<vmem>>, %arg15: memref<1x256xf32, #tpu.memory_space<vmem>>, %arg16: memref<1x256xf32, #tpu.memory_space<vmem>>) attributes {dimension_semantics = [#tpu.dimension_semantics<arbitrary>, #tpu.dimension_semantics<arbitrary>], iteration_bounds = array<i64: 3, 4>, scalar_prefetch = 0 : i64, scratch_operands = 5 : i64, tpu.core_type = #tpu.core_type<tc>, window_params = [{transform_indices = @transform_0, window_bounds = array<i64: 32, 64>}, {pipeline_mode = #tpu.pipeline_mode<synchronous>, transform_indices = @transform_1, window_bounds = array<i64: 64, 256>}, {pipeline_mode = #tpu.pipeline_mode<synchronous>, transform_indices = @transform_2, window_bounds = array<i64: 1, 256>}, {pipeline_mode = #tpu.pipeline_mode<synchronous>, transform_indices = @transform_3, window_bounds = array<i64: 1, 256>}, {pipeline_mode = #tpu.pipeline_mode<synchronous>, transform_indices = @transform_4, window_bounds = array<i64: 256, 256>}, {pipeline_mode = #tpu.pipeline_mode<synchronous>, transform_indices = @transform_5, window_bounds = array<i64: 1, 256>}, {pipeline_mode = #tpu.pipeline_mode<synchronous>, transform_indices = @transform_6, window_bounds = array<i64: 1, 256>}, {pipeline_mode = #tpu.pipeline_mode<synchronous>, transform_indices = @transform_7, window_bounds = array<i64: 256, 256>}, {pipeline_mode = #tpu.pipeline_mode<synchronous>, transform_indices = @transform_8, window_bounds = array<i64: 1, 256>}, {transform_indices = @transform_9, window_bounds = array<i64: 32, 256>}]} {
    %c32_i32 = arith.constant 32 : i32
    %0 = arith.muli %arg1, %c32_i32 : i32
    %1 = tpu.assume_multiple %0, 32 : i32
    %c0_i32 = arith.constant 0 : i32
    %2 = arith.cmpi eq, %arg0, %c0_i32 : i32
    %3 = arith.extui %2 : i1 to i32
    %c0_i32_0 = arith.constant 0 : i32
    %4 = arith.cmpi ne, %3, %c0_i32_0 : i32
    scf.if %4 {
      %c0_i32_6 = arith.constant 0 : i32
      %11 = arith.cmpi eq, %arg1, %c0_i32_6 : i32
      %12 = arith.extui %11 : i1 to i32
      %c0_i32_7 = arith.constant 0 : i32
      %13 = arith.cmpi ne, %12, %c0_i32_7 : i32
      scf.if %13 {
        %cst_23 = arith.constant 0.000000e+00 : f32
        %30 = vector.broadcast %cst_23 : f32 to vector<1x256xf32>
        %c0_24 = arith.constant 0 : index
        %c0_25 = arith.constant 0 : index
        %31 = vector.load %arg13[%c0_24, %c0_25] : memref<1x256xf32, #tpu.memory_space<vmem>>, vector<1x256xf32>
        tpu.vector_store %arg13[%c0_24, %c0_25], %30 {strides = array<i32>} : memref<1x256xf32, #tpu.memory_space<vmem>>, vector<1x256xf32>,
        %cst_26 = arith.constant 0.000000e+00 : f32
        %32 = vector.broadcast %cst_26 : f32 to vector<1x256xf32>
        %c0_27 = arith.constant 0 : index
        %c0_28 = arith.constant 0 : index
        %33 = vector.load %arg14[%c0_27, %c0_28] : memref<1x256xf32, #tpu.memory_space<vmem>>, vector<1x256xf32>
        tpu.vector_store %arg14[%c0_27, %c0_28], %32 {strides = array<i32>} : memref<1x256xf32, #tpu.memory_space<vmem>>, vector<1x256xf32>,
      } else {
      }
      %c0 = arith.constant 0 : index
      %c0_8 = arith.constant 0 : index
      %14 = vector.load %arg2[%c0, %c0_8] : memref<32x64xbf16, #tpu.memory_space<vmem>>, vector<32x64xbf16>
      %c0_9 = arith.constant 0 : index
      %c0_10 = arith.constant 0 : index
      %15 = vector.load %arg3[%c0_9, %c0_10] : memref<64x256xbf16, #tpu.memory_space<vmem>>, vector<64x256xbf16>
      %cst_11 = arith.constant dense<0.000000e+00> : vector<32x256xf32>
      %16 = tpu.matmul %14, %15, %cst_11 {dimension_numbers = #tpu.dot_dimension_numbers<[1], [0], [0], [1], [0, 0, 1, 1], [], []>} : vector<32x64xbf16>, vector<64x256xbf16>, vector<32x256xf32> -> vector<32x256xf32>
      %17 = arith.index_cast %1 : i32 to index
      %c0_12 = arith.constant 0 : index
      %18 = vector.load %arg12[%17, %c0_12] : memref<128x256xf32, #tpu.memory_space<vmem>>, vector<32x256xf32>
      tpu.vector_store %arg12[%17, %c0_12], %16 {strides = array<i32>} : memref<128x256xf32, #tpu.memory_space<vmem>>, vector<32x256xf32>,
      %c0_13 = arith.constant 0 : index
      %c0_14 = arith.constant 0 : index
      %19 = vector.load %arg13[%c0_13, %c0_14] : memref<1x256xf32, #tpu.memory_space<vmem>>, vector<1x256xf32>
      %cst_15 = arith.constant dense<0.000000e+00> : vector<256xf32>
      %20 = vector.multi_reduction <add>, %16, %cst_15 [0] : vector<32x256xf32> to vector<256xf32>
      %21 = vector.shape_cast %20 : vector<256xf32> to vector<1x256xf32>
      %22 = arith.addf %19, %21 : vector<1x256xf32>
      %c0_16 = arith.constant 0 : index
      %c0_17 = arith.constant 0 : index
      %23 = vector.load %arg13[%c0_16, %c0_17] : memref<1x256xf32, #tpu.memory_space<vmem>>, vector<1x256xf32>
      tpu.vector_store %arg13[%c0_16, %c0_17], %22 {strides = array<i32>} : memref<1x256xf32, #tpu.memory_space<vmem>>, vector<1x256xf32>,
      %c0_18 = arith.constant 0 : index
      %c0_19 = arith.constant 0 : index
      %24 = vector.load %arg14[%c0_18, %c0_19] : memref<1x256xf32, #tpu.memory_space<vmem>>, vector<1x256xf32>
      %25 = arith.mulf %16, %16 : vector<32x256xf32>
      %cst_20 = arith.constant dense<0.000000e+00> : vector<256xf32>
      %26 = vector.multi_reduction <add>, %25, %cst_20 [0] : vector<32x256xf32> to vector<256xf32>
      %27 = vector.shape_cast %26 : vector<256xf32> to vector<1x256xf32>
      %28 = arith.addf %24, %27 : vector<1x256xf32>
      %c0_21 = arith.constant 0 : index
      %c0_22 = arith.constant 0 : index
      %29 = vector.load %arg14[%c0_21, %c0_22] : memref<1x256xf32, #tpu.memory_space<vmem>>, vector<1x256xf32>
      tpu.vector_store %arg14[%c0_21, %c0_22], %28 {strides = array<i32>} : memref<1x256xf32, #tpu.memory_space<vmem>>, vector<1x256xf32>,
    } else {
    }
    %c1_i32 = arith.constant 1 : i32
    %5 = arith.cmpi eq, %arg0, %c1_i32 : i32
    %6 = arith.extui %5 : i1 to i32
    %cst = arith.constant 7.812500e-03 : f32
    %cst_1 = arith.constant 9.99999974E-6 : f32
    %c0_i32_2 = arith.constant 0 : i32
    %7 = arith.cmpi ne, %6, %c0_i32_2 : i32
    scf.if %7 {
      %c0_i32_6 = arith.constant 0 : i32
      %11 = arith.cmpi eq, %arg1, %c0_i32_6 : i32
      %12 = arith.extui %11 : i1 to i32
      %c0_i32_7 = arith.constant 0 : i32
      %13 = arith.cmpi ne, %12, %c0_i32_7 : i32
      scf.if %13 {
        %c0_27 = arith.constant 0 : index
        %c0_28 = arith.constant 0 : index
        %40 = vector.load %arg4[%c0_27, %c0_28] : memref<1x256xf32, #tpu.memory_space<vmem>>, vector<1x256xf32>
        %c0_29 = arith.constant 0 : index
        %c0_30 = arith.constant 0 : index
        %41 = vector.load %arg5[%c0_29, %c0_30] : memref<1x256xf32, #tpu.memory_space<vmem>>, vector<1x256xf32>
        %c0_31 = arith.constant 0 : index
        %c0_32 = arith.constant 0 : index
        %42 = vector.load %arg13[%c0_31, %c0_32] : memref<1x256xf32, #tpu.memory_space<vmem>>, vector<1x256xf32>
        %43 = vector.broadcast %cst : f32 to vector<1x256xf32>
        %44 = arith.mulf %42, %43 : vector<1x256xf32>
        %c0_33 = arith.constant 0 : index
        %c0_34 = arith.constant 0 : index
        %45 = vector.load %arg14[%c0_33, %c0_34] : memref<1x256xf32, #tpu.memory_space<vmem>>, vector<1x256xf32>
        %46 = vector.broadcast %cst : f32 to vector<1x256xf32>
        %47 = arith.mulf %45, %46 : vector<1x256xf32>
        %48 = arith.mulf %44, %44 : vector<1x256xf32>
        %49 = arith.subf %47, %48 : vector<1x256xf32>
        %cst_35 = arith.constant 0.000000e+00 : f32
        %50 = vector.broadcast %cst_35 : f32 to vector<1x256xf32>
        %51 = arith.maximumf %49, %50 : vector<1x256xf32>
        %52 = vector.broadcast %cst_1 : f32 to vector<1x256xf32>
        %53 = arith.addf %51, %52 : vector<1x256xf32>
        %54 = math.rsqrt %53 : vector<1x256xf32>
        %55 = arith.mulf %40, %54 : vector<1x256xf32>
        %56 = arith.mulf %44, %55 : vector<1x256xf32>
        %57 = arith.subf %41, %56 : vector<1x256xf32>
        %c0_36 = arith.constant 0 : index
        %c0_37 = arith.constant 0 : index
        %58 = vector.load %arg15[%c0_36, %c0_37] : memref<1x256xf32, #tpu.memory_space<vmem>>, vector<1x256xf32>
        tpu.vector_store %arg15[%c0_36, %c0_37], %55 {strides = array<i32>} : memref<1x256xf32, #tpu.memory_space<vmem>>, vector<1x256xf32>,
        %c0_38 = arith.constant 0 : index
        %c0_39 = arith.constant 0 : index
        %59 = vector.load %arg16[%c0_38, %c0_39] : memref<1x256xf32, #tpu.memory_space<vmem>>, vector<1x256xf32>
        tpu.vector_store %arg16[%c0_38, %c0_39], %57 {strides = array<i32>} : memref<1x256xf32, #tpu.memory_space<vmem>>, vector<1x256xf32>,
        %cst_40 = arith.constant 0.000000e+00 : f32
        %60 = vector.broadcast %cst_40 : f32 to vector<1x256xf32>
        %c0_41 = arith.constant 0 : index
        %c0_42 = arith.constant 0 : index
        %61 = vector.load %arg13[%c0_41, %c0_42] : memref<1x256xf32, #tpu.memory_space<vmem>>, vector<1x256xf32>
        tpu.vector_store %arg13[%c0_41, %c0_42], %60 {strides = array<i32>} : memref<1x256xf32, #tpu.memory_space<vmem>>, vector<1x256xf32>,
        %cst_43 = arith.constant 0.000000e+00 : f32
        %62 = vector.broadcast %cst_43 : f32 to vector<1x256xf32>
        %c0_44 = arith.constant 0 : index
        %c0_45 = arith.constant 0 : index
        %63 = vector.load %arg14[%c0_44, %c0_45] : memref<1x256xf32, #tpu.memory_space<vmem>>, vector<1x256xf32>
        tpu.vector_store %arg14[%c0_44, %c0_45], %62 {strides = array<i32>} : memref<1x256xf32, #tpu.memory_space<vmem>>, vector<1x256xf32>,
      } else {
      }
      %14 = arith.index_cast %1 : i32 to index
      %c0 = arith.constant 0 : index
      %15 = vector.load %arg12[%14, %c0] : memref<128x256xf32, #tpu.memory_space<vmem>>, vector<32x256xf32>
      %c0_8 = arith.constant 0 : index
      %c0_9 = arith.constant 0 : index
      %16 = vector.load %arg15[%c0_8, %c0_9] : memref<1x256xf32, #tpu.memory_space<vmem>>, vector<1x256xf32>
      %17 = vector.broadcast %16 : vector<1x256xf32> to vector<32x256xf32>
      %18 = arith.mulf %15, %17 : vector<32x256xf32>
      %c0_10 = arith.constant 0 : index
      %c0_11 = arith.constant 0 : index
      %19 = vector.load %arg16[%c0_10, %c0_11] : memref<1x256xf32, #tpu.memory_space<vmem>>, vector<1x256xf32>
      %20 = vector.broadcast %19 : vector<1x256xf32> to vector<32x256xf32>
      %21 = arith.addf %18, %20 : vector<32x256xf32>
      %cst_12 = arith.constant 0.000000e+00 : f32
      %22 = vector.broadcast %cst_12 : f32 to vector<32x256xf32>
      %23 = arith.maximumf %21, %22 : vector<32x256xf32>
      %24 = arith.truncf %23 : vector<32x256xf32> to vector<32x256xbf16>
      %c0_13 = arith.constant 0 : index
      %c0_14 = arith.constant 0 : index
      %25 = vector.load %arg6[%c0_13, %c0_14] : memref<256x256xbf16, #tpu.memory_space<vmem>>, vector<256x256xbf16>
      %cst_15 = arith.constant dense<0.000000e+00> : vector<32x256xf32>
      %26 = tpu.matmul %24, %25, %cst_15 {dimension_numbers = #tpu.dot_dimension_numbers<[1], [0], [0], [1], [0, 0, 1, 1], [], []>} : vector<32x256xbf16>, vector<256x256xbf16>, vector<32x256xf32> -> vector<32x256xf32>
      %27 = arith.index_cast %1 : i32 to index
      %c0_16 = arith.constant 0 : index
      %28 = vector.load %arg12[%27, %c0_16] : memref<128x256xf32, #tpu.memory_space<vmem>>, vector<32x256xf32>
      tpu.vector_store %arg12[%27, %c0_16], %26 {strides = array<i32>} : memref<128x256xf32, #tpu.memory_space<vmem>>, vector<32x256xf32>,
      %c0_17 = arith.constant 0 : index
      %c0_18 = arith.constant 0 : index
      %29 = vector.load %arg13[%c0_17, %c0_18] : memref<1x256xf32, #tpu.memory_space<vmem>>, vector<1x256xf32>
      %cst_19 = arith.constant dense<0.000000e+00> : vector<256xf32>
      %30 = vector.multi_reduction <add>, %26, %cst_19 [0] : vector<32x256xf32> to vector<256xf32>
      %31 = vector.shape_cast %30 : vector<256xf32> to vector<1x256xf32>
      %32 = arith.addf %29, %31 : vector<1x256xf32>
      %c0_20 = arith.constant 0 : index
      %c0_21 = arith.constant 0 : index
      %33 = vector.load %arg13[%c0_20, %c0_21] : memref<1x256xf32, #tpu.memory_space<vmem>>, vector<1x256xf32>
      tpu.vector_store %arg13[%c0_20, %c0_21], %32 {strides = array<i32>} : memref<1x256xf32, #tpu.memory_space<vmem>>, vector<1x256xf32>,
      %c0_22 = arith.constant 0 : index
      %c0_23 = arith.constant 0 : index
      %34 = vector.load %arg14[%c0_22, %c0_23] : memref<1x256xf32, #tpu.memory_space<vmem>>, vector<1x256xf32>
      %35 = arith.mulf %26, %26 : vector<32x256xf32>
      %cst_24 = arith.constant dense<0.000000e+00> : vector<256xf32>
      %36 = vector.multi_reduction <add>, %35, %cst_24 [0] : vector<32x256xf32> to vector<256xf32>
      %37 = vector.shape_cast %36 : vector<256xf32> to vector<1x256xf32>
      %38 = arith.addf %34, %37 : vector<1x256xf32>
      %c0_25 = arith.constant 0 : index
      %c0_26 = arith.constant 0 : index
      %39 = vector.load %arg14[%c0_25, %c0_26] : memref<1x256xf32, #tpu.memory_space<vmem>>, vector<1x256xf32>
      tpu.vector_store %arg14[%c0_25, %c0_26], %38 {strides = array<i32>} : memref<1x256xf32, #tpu.memory_space<vmem>>, vector<1x256xf32>,
    } else {
    }
    %c2_i32 = arith.constant 2 : i32
    %8 = arith.cmpi eq, %arg0, %c2_i32 : i32
    %9 = arith.extui %8 : i1 to i32
    %cst_3 = arith.constant 7.812500e-03 : f32
    %cst_4 = arith.constant 9.99999974E-6 : f32
    %c0_i32_5 = arith.constant 0 : i32
    %10 = arith.cmpi ne, %9, %c0_i32_5 : i32
    scf.if %10 {
      %c0_i32_6 = arith.constant 0 : i32
      %11 = arith.cmpi eq, %arg1, %c0_i32_6 : i32
      %12 = arith.extui %11 : i1 to i32
      %c0_i32_7 = arith.constant 0 : i32
      %13 = arith.cmpi ne, %12, %c0_i32_7 : i32
      scf.if %13 {
        %c0_20 = arith.constant 0 : index
        %c0_21 = arith.constant 0 : index
        %31 = vector.load %arg7[%c0_20, %c0_21] : memref<1x256xf32, #tpu.memory_space<vmem>>, vector<1x256xf32>
        %c0_22 = arith.constant 0 : index
        %c0_23 = arith.constant 0 : index
        %32 = vector.load %arg8[%c0_22, %c0_23] : memref<1x256xf32, #tpu.memory_space<vmem>>, vector<1x256xf32>
        %c0_24 = arith.constant 0 : index
        %c0_25 = arith.constant 0 : index
        %33 = vector.load %arg13[%c0_24, %c0_25] : memref<1x256xf32, #tpu.memory_space<vmem>>, vector<1x256xf32>
        %34 = vector.broadcast %cst_3 : f32 to vector<1x256xf32>
        %35 = arith.mulf %33, %34 : vector<1x256xf32>
        %c0_26 = arith.constant 0 : index
        %c0_27 = arith.constant 0 : index
        %36 = vector.load %arg14[%c0_26, %c0_27] : memref<1x256xf32, #tpu.memory_space<vmem>>, vector<1x256xf32>
        %37 = vector.broadcast %cst_3 : f32 to vector<1x256xf32>
        %38 = arith.mulf %36, %37 : vector<1x256xf32>
        %39 = arith.mulf %35, %35 : vector<1x256xf32>
        %40 = arith.subf %38, %39 : vector<1x256xf32>
        %cst_28 = arith.constant 0.000000e+00 : f32
        %41 = vector.broadcast %cst_28 : f32 to vector<1x256xf32>
        %42 = arith.maximumf %40, %41 : vector<1x256xf32>
        %43 = vector.broadcast %cst_4 : f32 to vector<1x256xf32>
        %44 = arith.addf %42, %43 : vector<1x256xf32>
        %45 = math.rsqrt %44 : vector<1x256xf32>
        %46 = arith.mulf %31, %45 : vector<1x256xf32>
        %47 = arith.mulf %35, %46 : vector<1x256xf32>
        %48 = arith.subf %32, %47 : vector<1x256xf32>
        %c0_29 = arith.constant 0 : index
        %c0_30 = arith.constant 0 : index
        %49 = vector.load %arg15[%c0_29, %c0_30] : memref<1x256xf32, #tpu.memory_space<vmem>>, vector<1x256xf32>
        tpu.vector_store %arg15[%c0_29, %c0_30], %46 {strides = array<i32>} : memref<1x256xf32, #tpu.memory_space<vmem>>, vector<1x256xf32>,
        %c0_31 = arith.constant 0 : index
        %c0_32 = arith.constant 0 : index
        %50 = vector.load %arg16[%c0_31, %c0_32] : memref<1x256xf32, #tpu.memory_space<vmem>>, vector<1x256xf32>
        tpu.vector_store %arg16[%c0_31, %c0_32], %48 {strides = array<i32>} : memref<1x256xf32, #tpu.memory_space<vmem>>, vector<1x256xf32>,
      } else {
      }
      %14 = arith.index_cast %1 : i32 to index
      %c0 = arith.constant 0 : index
      %15 = vector.load %arg12[%14, %c0] : memref<128x256xf32, #tpu.memory_space<vmem>>, vector<32x256xf32>
      %c0_8 = arith.constant 0 : index
      %c0_9 = arith.constant 0 : index
      %16 = vector.load %arg15[%c0_8, %c0_9] : memref<1x256xf32, #tpu.memory_space<vmem>>, vector<1x256xf32>
      %17 = vector.broadcast %16 : vector<1x256xf32> to vector<32x256xf32>
      %18 = arith.mulf %15, %17 : vector<32x256xf32>
      %c0_10 = arith.constant 0 : index
      %c0_11 = arith.constant 0 : index
      %19 = vector.load %arg16[%c0_10, %c0_11] : memref<1x256xf32, #tpu.memory_space<vmem>>, vector<1x256xf32>
      %20 = vector.broadcast %19 : vector<1x256xf32> to vector<32x256xf32>
      %21 = arith.addf %18, %20 : vector<32x256xf32>
      %cst_12 = arith.constant 0.000000e+00 : f32
      %22 = vector.broadcast %cst_12 : f32 to vector<32x256xf32>
      %23 = arith.maximumf %21, %22 : vector<32x256xf32>
      %24 = arith.truncf %23 : vector<32x256xf32> to vector<32x256xbf16>
      %c0_13 = arith.constant 0 : index
      %c0_14 = arith.constant 0 : index
      %25 = vector.load %arg9[%c0_13, %c0_14] : memref<256x256xbf16, #tpu.memory_space<vmem>>, vector<256x256xbf16>
      %cst_15 = arith.constant dense<0.000000e+00> : vector<32x256xf32>
      %26 = tpu.matmul %24, %25, %cst_15 {dimension_numbers = #tpu.dot_dimension_numbers<[1], [0], [0], [1], [0, 0, 1, 1], [], []>} : vector<32x256xbf16>, vector<256x256xbf16>, vector<32x256xf32> -> vector<32x256xf32>
      %c0_16 = arith.constant 0 : index
      %c0_17 = arith.constant 0 : index
      %27 = vector.load %arg10[%c0_16, %c0_17] : memref<1x256xf32, #tpu.memory_space<vmem>>, vector<1x256xf32>
      %28 = vector.broadcast %27 : vector<1x256xf32> to vector<32x256xf32>
      %29 = arith.addf %26, %28 : vector<32x256xf32>
      %c0_18 = arith.constant 0 : index
      %c0_19 = arith.constant 0 : index
      %30 = vector.load %arg11[%c0_18, %c0_19] : memref<32x256xf32, #tpu.memory_space<vmem>>, vector<32x256xf32>
      tpu.vector_store %arg11[%c0_18, %c0_19], %29 {strides = array<i32>} : memref<32x256xf32, #tpu.memory_space<vmem>>, vector<32x256xf32>,
    } else {
    }
    return
  }
  func.func @transform_0(%arg0: i32, %arg1: i32) -> (i32, i32) {
    %c0_i32 = arith.constant 0 : i32
    %0 = arith.cmpi eq, %arg0, %c0_i32 : i32
    %c0_i32_0 = arith.constant 0 : i32
    %1 = arith.select %0, %arg1, %c0_i32_0 : i32
    %c0_i32_1 = arith.constant 0 : i32
    %c0_i32_2 = arith.constant 0 : i32
    return %1, %c0_i32_1 : i32, i32
  }
  func.func @transform_1(%arg0: i32, %arg1: i32) -> (i32, i32) {
    %c0_i32 = arith.constant 0 : i32
    %c0_i32_0 = arith.constant 0 : i32
    %c0_i32_1 = arith.constant 0 : i32
    return %c0_i32, %c0_i32_0 : i32, i32
  }
  func.func @transform_2(%arg0: i32, %arg1: i32) -> (i32, i32) {
    %c0_i32 = arith.constant 0 : i32
    %c0_i32_0 = arith.constant 0 : i32
    %c0_i32_1 = arith.constant 0 : i32
    return %c0_i32, %c0_i32_0 : i32, i32
  }
  func.func @transform_3(%arg0: i32, %arg1: i32) -> (i32, i32) {
    %c0_i32 = arith.constant 0 : i32
    %c0_i32_0 = arith.constant 0 : i32
    %c0_i32_1 = arith.constant 0 : i32
    return %c0_i32, %c0_i32_0 : i32, i32
  }
  func.func @transform_4(%arg0: i32, %arg1: i32) -> (i32, i32) {
    %c0_i32 = arith.constant 0 : i32
    %c0_i32_0 = arith.constant 0 : i32
    %c0_i32_1 = arith.constant 0 : i32
    return %c0_i32, %c0_i32_0 : i32, i32
  }
  func.func @transform_5(%arg0: i32, %arg1: i32) -> (i32, i32) {
    %c0_i32 = arith.constant 0 : i32
    %c0_i32_0 = arith.constant 0 : i32
    %c0_i32_1 = arith.constant 0 : i32
    return %c0_i32, %c0_i32_0 : i32, i32
  }
  func.func @transform_6(%arg0: i32, %arg1: i32) -> (i32, i32) {
    %c0_i32 = arith.constant 0 : i32
    %c0_i32_0 = arith.constant 0 : i32
    %c0_i32_1 = arith.constant 0 : i32
    return %c0_i32, %c0_i32_0 : i32, i32
  }
  func.func @transform_7(%arg0: i32, %arg1: i32) -> (i32, i32) {
    %c0_i32 = arith.constant 0 : i32
    %c0_i32_0 = arith.constant 0 : i32
    %c0_i32_1 = arith.constant 0 : i32
    return %c0_i32, %c0_i32_0 : i32, i32
  }
  func.func @transform_8(%arg0: i32, %arg1: i32) -> (i32, i32) {
    %c0_i32 = arith.constant 0 : i32
    %c0_i32_0 = arith.constant 0 : i32
    %c0_i32_1 = arith.constant 0 : i32
    return %c0_i32, %c0_i32_0 : i32, i32
  }
  func.func @transform_9(%arg0: i32, %arg1: i32) -> (i32, i32) {
    %c2_i32 = arith.constant 2 : i32
    %0 = arith.cmpi eq, %arg0, %c2_i32 : i32
    %c0_i32 = arith.constant 0 : i32
    %1 = arith.select %0, %arg1, %c0_i32 : i32
    %c0_i32_0 = arith.constant 0 : i32
    %c0_i32_1 = arith.constant 0 : i32
    return %1, %c0_i32_0 : i32, i32
  }
}

</mosaic_0001>

<llo_original>
// kernel: tpu_custom_call.1
$region0: #{tpu_custom_call.1}
  #allocation0 [shape = 'u32[]', space=smem, size = 0x4, offset = 0x4, fixed_abs, tag = 'smem constant byte address 0x4 - core index']
  #allocation1 [shape = 'u32[144,128]{1,0:T(1,128)}', space=vmem, size = 0x12000, scoped, tag = 'internal scratch']
  #allocation2 [shape = 'f32[128,256]{1,0:T(8,128)}', space=vmem, size = 0x20000, scoped, tag = 'scratch operand']
  #allocation3 [shape = 'f32[1,256]{1,0:T(1,128)}', space=vmem, size = 0x400, scoped, tag = 'scratch operand']
  #allocation4 [shape = 'f32[1,256]{1,0:T(1,128)}', space=vmem, size = 0x400, scoped, tag = 'scratch operand']
  #allocation5 [shape = 'f32[1,256]{1,0:T(1,128)}', space=vmem, size = 0x400, scoped, tag = 'scratch operand']
  #allocation6 [shape = 'f32[1,256]{1,0:T(1,128)}', space=vmem, size = 0x400, scoped, tag = 'scratch operand']
  %s0 = inlined_call_operand.vmem [shape: bf16[128,64], index: 0, kind: input, shape index: {}]
  %s1 = inlined_call_operand.vmem [shape: bf16[64,256], index: 1, kind: input, shape index: {}]
  %s2 = inlined_call_operand.vmem [shape: f32[1,256], index: 2, kind: input, shape index: {}]
  %s3 = inlined_call_operand.vmem [shape: f32[1,256], index: 3, kind: input, shape index: {}]
  %s4 = inlined_call_operand.hbm [shape: bf16[256,256], index: 4, kind: input, shape index: {}]
  %s5 = inlined_call_operand.vmem [shape: f32[1,256], index: 5, kind: input, shape index: {}]
  %s6 = inlined_call_operand.vmem [shape: f32[1,256], index: 6, kind: input, shape index: {}]
  %s7 = inlined_call_operand.hbm [shape: bf16[256,256], index: 7, kind: input, shape index: {}]
  %s8 = inlined_call_operand.vmem [shape: f32[1,256], index: 8, kind: input, shape index: {}]
  %s9 = inlined_call_operand.hbm [shape: f32[128,256], index: 9, kind: output, shape index: {}]
  %s10 = sld [smem:[#allocation0]]
  $region101: #{tpu_custom_call.1} parent=0
    _
  %s12 = ssub.s32 1, %s10
  %s13 = scalar_select 0, %s12, %s10
  $region1: #{tpu_custom_call.1} parent=0
    #allocation7 [shape = 'u8[131072]{0}', space=vmem, size = 0x20000, scoped, tag = 'input window, operand 4, single buffered']
    #allocation8 [shape = 's32[2]{0}', space=sflag, size = 0x8, scoped, tag = 'scoped memory for tpu_custom_call.1']
    #allocation9 [shape = 's32[2]{0}', space=sflag, size = 0x8, scoped, tag = 'scoped memory for tpu_custom_call.1']
    #allocation10 [shape = 'u8[131072]{0}', space=vmem, size = 0x20000, scoped, tag = 'input window, operand 7, single buffered']
    #allocation11 [shape = 's32[1]{0}', space=sflag, size = 0x4, scoped, tag = 'scoped memory for tpu_custom_call.1']
    #allocation12 [shape = 'u8[65536]{0}', space=vmem, size = 0x10000, scoped, tag = 'output window, operand 0']
    %14 = vsyncpa [#allocation8], 0
    %15 = vsyncpa [#allocation11], 0
    %16 = vsyncpa [#allocation9], 0
    %s17 = scalar_lea.sflag [#allocation9], 1
    %18 = vsyncpa %s17, 0
    loop: start=0, step=1, limit=14
    $region2: #{tpu_custom_call.1} parent=1 // loop_pre_header
      _
    $region3: #{tpu_custom_call.1} parent=1 // loop_header
      %s20 = sphi 0, %s24
      %p21 = scmp.ge.s32.totalorder %s20, 14
      %s27 = sphi 0, %s39
      %s28 = sphi 0, %s35
      %s29 = sphi 0, %s27
      %s30 = sphi 0, %s28
      %s31 = sphi 0, %s29
      %s32 = sphi 0, %s30
      %s46 = sphi 0, %s48
      %s49 = sphi 0, %s46
      %s50 = sphi 0, %s49
      %s66 = sphi 0, %s50
      %s70 = sphi 0, %s70
      %s72 = sphi 0, %s70
      %s73 = sphi 0, %s72
      %s87 = sphi 0, %s73
      %s91 = sphi 0, %s91
      %s93 = sphi 0, %s91
      %s94 = sphi 0, %s93
      %s108 = sphi 0, %s94
      %s112 = sphi 0, %s112
      %s114 = sphi 0, %s112
      %s115 = sphi 0, %s114
      %s129 = sphi 0, %s115
      %s133 = sphi 0, %s133
      %s135 = sphi 0, %s133
      %s136 = sphi 0, %s135
      %s150 = sphi 0, %s136
      %s154 = sphi 0, %s154
      %s156 = sphi 0, %s154
      %s157 = sphi 0, %s156
      %s171 = sphi 0, %s157
      %s175 = sphi 0, %s175
      %s177 = sphi 0, %s175
      %s178 = sphi 0, %s177
      %s192 = sphi 0, %s178
      %s196 = sphi 0, %s196
      %s198 = sphi 0, %s196
      %s199 = sphi 0, %s198
      %s213 = sphi 0, %s199
      %s217 = sphi 0, %s217
      %s219 = sphi 0, %s217
      %s220 = sphi 0, %s219
      %s234 = sphi 0, %s220
      %s244 = sphi 0, %s246
      %s247 = sphi 0, %s244
      %s248 = sphi 0, %s247
      %s264 = sphi 0, %s248
    $region4: #{tpu_custom_call.1} parent=1 // loop_header_branch
      %23 = sbr.rel (%p21) target = $region8
    $region5: #{tpu_custom_call.1} parent=1 // loop_body
      %s25 = ssub.s32 %s20, 1
      %s26 = ssub.s32 %s20, 2
      %s33 = sadd.s32 1, %s28
      %p34 = scmp.ge.s32.totalorder %s33, 4
      %s35 = scalar_select %p34, 0, %s33
      %s36 = sadd.s32 1, %s27
      %s37 = scalar_select %p34, %s36, %s27
      %p38 = scmp.ge.s32.totalorder %s37, 3
      %s39 = scalar_select %p38, 0, %s37
      %p40 = scmp.eq.s32.totalorder %s27, 0
      %s41 = scalar_select %p40, %s28, 0
      %p42 = scmp.eq.s32.totalorder %s39, 0
      %s43 = scalar_select %p42, %s35, 0
      %s44 = ssub.s32 %s41, %s43
      %p45 = scmp.eq.s32.totalorder %s44, 0
      %s47 = sadd.s32 %s46, 1
      %s48 = scalar_select %p45, %s46, %s47
      %p51 = pneg %p45
      %p52 = scmp.eq.s32.totalorder %s20, 11
      %p53 = por %p51, %p52
      %p54 = scmp.ne.s32.totalorder %s46, %s49
      %p55 = scmp.eq.s32.totalorder %s20, 0
      %p56 = por %p54, %p55
      %p57 = scmp.ne.s32.totalorder %s46, %s49
      %p58 = scmp.eq.s32.totalorder %s25, 11
      %p59 = por %p57, %p58
      %p60 = scmp.ne.s32.totalorder %s49, %s50
      %p61 = scmp.eq.s32.totalorder %s25, 0
      %p62 = por %p60, %p61
      %p63 = scmp.ne.s32.totalorder %s49, %s50
      %p64 = scmp.eq.s32.totalorder %s26, 11
      %p65 = por %p63, %p64
      %p67 = scmp.ne.s32.totalorder %s50, %s66
      %p68 = scmp.eq.s32.totalorder %s26, 0
      %p69 = por %p67, %p68
      %s71 = sadd.s32 %s70, 1
      %p74 = scmp.eq.s32.totalorder %s20, 11
      %p75 = scmp.ne.s32.totalorder %s70, %s72
      %p76 = scmp.eq.s32.totalorder %s20, 0
      %p77 = por %p75, %p76
      %p78 = scmp.ne.s32.totalorder %s70, %s72
      %p79 = scmp.eq.s32.totalorder %s25, 11
      %p80 = por %p78, %p79
      %p81 = scmp.ne.s32.totalorder %s72, %s73
      %p82 = scmp.eq.s32.totalorder %s25, 0
      %p83 = por %p81, %p82
      %p84 = scmp.ne.s32.totalorder %s72, %s73
      %p85 = scmp.eq.s32.totalorder %s26, 11
      %p86 = por %p84, %p85
      %p88 = scmp.ne.s32.totalorder %s73, %s87
      %p89 = scmp.eq.s32.totalorder %s26, 0
      %p90 = por %p88, %p89
      %s92 = sadd.s32 %s91, 1
      %p95 = scmp.eq.s32.totalorder %s20, 11
      %p96 = scmp.ne.s32.totalorder %s91, %s93
      %p97 = scmp.eq.s32.totalorder %s20, 0
      %p98 = por %p96, %p97
      %p99 = scmp.ne.s32.totalorder %s91, %s93
      %p100 = scmp.eq.s32.totalorder %s25, 11
      %p101 = por %p99, %p100
      %p102 = scmp.ne.s32.totalorder %s93, %s94
      %p103 = scmp.eq.s32.totalorder %s25, 0
      %p104 = por %p102, %p103
      %p105 = scmp.ne.s32.totalorder %s93, %s94
      %p106 = scmp.eq.s32.totalorder %s26, 11
      %p107 = por %p105, %p106
      %p109 = scmp.ne.s32.totalorder %s94, %s108
      %p110 = scmp.eq.s32.totalorder %s26, 0
      %p111 = por %p109, %p110
      %s113 = sadd.s32 %s112, 1
      %p116 = scmp.eq.s32.totalorder %s20, 11
      %p117 = scmp.ne.s32.totalorder %s112, %s114
      %p118 = scmp.eq.s32.totalorder %s20, 0
      %p119 = por %p117, %p118
      %p120 = scmp.ne.s32.totalorder %s112, %s114
      %p121 = scmp.eq.s32.totalorder %s25, 11
      %p122 = por %p120, %p121
      %p123 = scmp.ne.s32.totalorder %s114, %s115
      %p124 = scmp.eq.s32.totalorder %s25, 0
      %p125 = por %p123, %p124
      %p126 = scmp.ne.s32.totalorder %s114, %s115
      %p127 = scmp.eq.s32.totalorder %s26, 11
      %p128 = por %p126, %p127
      %p130 = scmp.ne.s32.totalorder %s115, %s129
      %p131 = scmp.eq.s32.totalorder %s26, 0
      %p132 = por %p130, %p131
      %s134 = sadd.s32 %s133, 1
      %p137 = scmp.eq.s32.totalorder %s20, 11
      %p138 = scmp.ne.s32.totalorder %s133, %s135
      %p139 = scmp.eq.s32.totalorder %s20, 0
      %p140 = por %p138, %p139
      %p141 = scmp.ne.s32.totalorder %s133, %s135
      %p142 = scmp.eq.s32.totalorder %s25, 11
      %p143 = por %p141, %p142
      %p144 = scmp.ne.s32.totalorder %s135, %s136
      %p145 = scmp.eq.s32.totalorder %s25, 0
      %p146 = por %p144, %p145
      %p147 = scmp.ne.s32.totalorder %s135, %s136
      %p148 = scmp.eq.s32.totalorder %s26, 11
      %p149 = por %p147, %p148
      %p151 = scmp.ne.s32.totalorder %s136, %s150
      %p152 = scmp.eq.s32.totalorder %s26, 0
      %p153 = por %p151, %p152
      %s155 = sadd.s32 %s154, 1
      %p158 = scmp.eq.s32.totalorder %s20, 11
      %p159 = scmp.ne.s32.totalorder %s154, %s156
      %p160 = scmp.eq.s32.totalorder %s20, 0
      %p161 = por %p159, %p160
      %p162 = scmp.ne.s32.totalorder %s154, %s156
      %p163 = scmp.eq.s32.totalorder %s25, 11
      %p164 = por %p162, %p163
      %p165 = scmp.ne.s32.totalorder %s156, %s157
      %p166 = scmp.eq.s32.totalorder %s25, 0
      %p167 = por %p165, %p166
      %p168 = scmp.ne.s32.totalorder %s156, %s157
      %p169 = scmp.eq.s32.totalorder %s26, 11
      %p170 = por %p168, %p169
      %p172 = scmp.ne.s32.totalorder %s157, %s171
      %p173 = scmp.eq.s32.totalorder %s26, 0
      %p174 = por %p172, %p173
      %s176 = sadd.s32 %s175, 1
      %p179 = scmp.eq.s32.totalorder %s20, 11
      %p180 = scmp.ne.s32.totalorder %s175, %s177
      %p181 = scmp.eq.s32.totalorder %s20, 0
      %p182 = por %p180, %p181
      %p183 = scmp.ne.s32.totalorder %s175, %s177
      %p184 = scmp.eq.s32.totalorder %s25, 11
      %p185 = por %p183, %p184
      %p186 = scmp.ne.s32.totalorder %s177, %s178
      %p187 = scmp.eq.s32.totalorder %s25, 0
      %p188 = por %p186, %p187
      %p189 = scmp.ne.s32.totalorder %s177, %s178
      %p190 = scmp.eq.s32.totalorder %s26, 11
      %p191 = por %p189, %p190
      %p193 = scmp.ne.s32.totalorder %s178, %s192
      %p194 = scmp.eq.s32.totalorder %s26, 0
      %p195 = por %p193, %p194
      %s197 = sadd.s32 %s196, 1
      %p200 = scmp.eq.s32.totalorder %s20, 11
      %p201 = scmp.ne.s32.totalorder %s196, %s198
      %p202 = scmp.eq.s32.totalorder %s20, 0
      %p203 = por %p201, %p202
      %p204 = scmp.ne.s32.totalorder %s196, %s198
      %p205 = scmp.eq.s32.totalorder %s25, 11
      %p206 = por %p204, %p205
      %p207 = scmp.ne.s32.totalorder %s198, %s199
      %p208 = scmp.eq.s32.totalorder %s25, 0
      %p209 = por %p207, %p208
      %p210 = scmp.ne.s32.totalorder %s198, %s199
      %p211 = scmp.eq.s32.totalorder %s26, 11
      %p212 = por %p210, %p211
      %p214 = scmp.ne.s32.totalorder %s199, %s213
      %p215 = scmp.eq.s32.totalorder %s26, 0
      %p216 = por %p214, %p215
      %s218 = sadd.s32 %s217, 1
      %p221 = scmp.eq.s32.totalorder %s20, 11
      %p222 = scmp.ne.s32.totalorder %s217, %s219
      %p223 = scmp.eq.s32.totalorder %s20, 0
      %p224 = por %p222, %p223
      %p225 = scmp.ne.s32.totalorder %s217, %s219
      %p226 = scmp.eq.s32.totalorder %s25, 11
      %p227 = por %p225, %p226
      %p228 = scmp.ne.s32.totalorder %s219, %s220
      %p229 = scmp.eq.s32.totalorder %s25, 0
      %p230 = por %p228, %p229
      %p231 = scmp.ne.s32.totalorder %s219, %s220
      %p232 = scmp.eq.s32.totalorder %s26, 11
      %p233 = por %p231, %p232
      %p235 = scmp.ne.s32.totalorder %s220, %s234
      %p236 = scmp.eq.s32.totalorder %s26, 0
      %p237 = por %p235, %p236
      %p238 = scmp.eq.s32.totalorder %s27, 2
      %s239 = scalar_select %p238, %s28, 0
      %p240 = scmp.eq.s32.totalorder %s39, 2
      %s241 = scalar_select %p240, %s35, 0
      %s242 = ssub.s32 %s239, %s241
      %p243 = scmp.eq.s32.totalorder %s242, 0
      %s245 = sadd.s32 %s244, 1
      %s246 = scalar_select %p243, %s244, %s245
      %p249 = pneg %p243
      %p250 = scmp.eq.s32.totalorder %s20, 11
      %p251 = por %p249, %p250
      %p252 = scmp.ne.s32.totalorder %s244, %s247
      %p253 = scmp.eq.s32.totalorder %s20, 0
      %p254 = por %p252, %p253
      %p255 = scmp.ne.s32.totalorder %s244, %s247
      %p256 = scmp.eq.s32.totalorder %s25, 11
      %p257 = por %p255, %p256
      %p258 = scmp.ne.s32.totalorder %s247, %s248
      %p259 = scmp.eq.s32.totalorder %s25, 0
      %p260 = por %p258, %p259
      %p261 = scmp.ne.s32.totalorder %s247, %s248
      %p262 = scmp.eq.s32.totalorder %s26, 11
      %p263 = por %p261, %p262
      %p265 = scmp.ne.s32.totalorder %s248, %s264
      %p266 = scmp.eq.s32.totalorder %s26, 0
      %p267 = por %p265, %p266
      %p268 = scmp.le.s32.totalorder 1, %s20
      %p269 = scmp.lt.s32.totalorder %s20, 13
      %p270 = pnand %p268, %p269
      %p271 = pneg %p270
      // Predicated region
      $region9: #{tpu_custom_call.1} parent=5 // pred_check
        _
      $region10: #{tpu_custom_call.1} parent=5 // pred_check_branch
        %273 = sbr.rel (%p270) target = $region12
      $region11: #{tpu_custom_call.1} parent=5 // pred_region
        %s274 = ssub.s32 %s20, 1
        // Predicated region
        $region13: #{tpu_custom_call.1} parent=11 // pred_check
          %p275 = pneg %p83
        $region14: #{tpu_custom_call.1} parent=11 // pred_check_branch
          %277 = sbr.rel (%p275) target = $region16
        $region15: #{tpu_custom_call.1} parent=11 // pred_region
          _
        $region16: #{tpu_custom_call.1} parent=11 // pred_fallthru
          _
        // Predicated region
        $region17: #{tpu_custom_call.1} parent=11 // pred_check
          %p278 = pneg %p104
        $region18: #{tpu_custom_call.1} parent=11 // pred_check_branch
          %280 = sbr.rel (%p278) target = $region20
        $region19: #{tpu_custom_call.1} parent=11 // pred_region
          _
        $region20: #{tpu_custom_call.1} parent=11 // pred_fallthru
          _
        // Predicated region
        $region21: #{tpu_custom_call.1} parent=11 // pred_check
          %p281 = pneg %p125
        $region22: #{tpu_custom_call.1} parent=11 // pred_check_branch
          %283 = sbr.rel (%p281) target = $region24
        $region23: #{tpu_custom_call.1} parent=11 // pred_region
          _
        $region24: #{tpu_custom_call.1} parent=11 // pred_fallthru
          _
        // Predicated region
        $region25: #{tpu_custom_call.1} parent=11 // pred_check
          %p284 = pneg %p146
        $region26: #{tpu_custom_call.1} parent=11 // pred_check_branch
          %286 = sbr.rel (%p284) target = $region28
        $region27: #{tpu_custom_call.1} parent=11 // pred_region
          %s288 = ssub.s32 4096, 4096
          %289 = vsyncadd [#allocation8], %s288
          %s290 = sshll.u32 [#allocation7], 4
          %s291 = int_to_ptr.vmem [resolvable:$true] %s290
          %296 = dma.hbm_to_vmem [thread:$0]  %s4, 4096, %s291, [#allocation8], 128, 128, 8
        $region28: #{tpu_custom_call.1} parent=11 // pred_fallthru
          _
        // Predicated region
        $region29: #{tpu_custom_call.1} parent=11 // pred_check
          %p297 = pneg %p167
        $region30: #{tpu_custom_call.1} parent=11 // pred_check_branch
          %299 = sbr.rel (%p297) target = $region32
        $region31: #{tpu_custom_call.1} parent=11 // pred_region
          _
        $region32: #{tpu_custom_call.1} parent=11 // pred_fallthru
          _
        // Predicated region
        $region33: #{tpu_custom_call.1} parent=11 // pred_check
          %p300 = pneg %p188
        $region34: #{tpu_custom_call.1} parent=11 // pred_check_branch
          %302 = sbr.rel (%p300) target = $region36
        $region35: #{tpu_custom_call.1} parent=11 // pred_region
          _
        $region36: #{tpu_custom_call.1} parent=11 // pred_fallthru
          _
        // Predicated region
        $region37: #{tpu_custom_call.1} parent=11 // pred_check
          %p303 = pneg %p209
        $region38: #{tpu_custom_call.1} parent=11 // pred_check_branch
          %305 = sbr.rel (%p303) target = $region40
        $region39: #{tpu_custom_call.1} parent=11 // pred_region
          %s307 = ssub.s32 4096, 4096
          %308 = vsyncadd [#allocation11], %s307
          %s309 = sshll.u32 [#allocation10], 4
          %s310 = int_to_ptr.vmem [resolvable:$true] %s309
          %315 = dma.hbm_to_vmem [thread:$0]  %s7, 4096, %s310, [#allocation11], 128, 128, 8
        $region40: #{tpu_custom_call.1} parent=11 // pred_fallthru
          _
        // Predicated region
        $region41: #{tpu_custom_call.1} parent=11 // pred_check
          %p316 = pneg %p230
        $region42: #{tpu_custom_call.1} parent=11 // pred_check_branch
          %318 = sbr.rel (%p316) target = $region44
        $region43: #{tpu_custom_call.1} parent=11 // pred_region
          _
        $region44: #{tpu_custom_call.1} parent=11 // pred_fallthru
          _
      $region12: #{tpu_custom_call.1} parent=5 // pred_fallthru
        _
      %p319 = scmp.lt.s32.totalorder %s20, 12
      // Predicated region
      $region45: #{tpu_custom_call.1} parent=5 // pred_check
        %p320 = pneg %p319
      $region46: #{tpu_custom_call.1} parent=5 // pred_check_branch
        %322 = sbr.rel (%p320) target = $region48
      $region47: #{tpu_custom_call.1} parent=5 // pred_region
        // Predicated region
        $region49: #{tpu_custom_call.1} parent=47 // pred_check
          %p323 = pneg %p56
        $region50: #{tpu_custom_call.1} parent=47 // pred_check_branch
          %325 = sbr.rel (%p323) target = $region52
        $region51: #{tpu_custom_call.1} parent=47 // pred_region
          %p326 = scmp.eq.s32.totalorder %s27, 0
          %s327 = scalar_select %p326, %s28, 0
          %s328 = smul.u32 4, %s327
          %p329 = scmp.lt.s32.totalorder %s328, 15
          %s330 = scalar_select %p329, %s328, 15
          %s331 = smul.addr %s330, 4
          %s332 = scalar_lea.vmem %s0, %s331
          %p333 = scmp.eq.s32.totalorder %s27, 0
          %s334 = scalar_select %p333, %s28, 0
          %s335 = smul.u32 4, %s334
        $region52: #{tpu_custom_call.1} parent=47 // pred_fallthru
          _
      $region48: #{tpu_custom_call.1} parent=5 // pred_fallthru
        _
      %p336 = scmp.le.s32.totalorder 1, %s20
      %p337 = scmp.lt.s32.totalorder %s20, 13
      %p338 = pnand %p336, %p337
      %p339 = pneg %p338
      // Predicated region
      $region53: #{tpu_custom_call.1} parent=5 // pred_check
        _
      $region54: #{tpu_custom_call.1} parent=5 // pred_check_branch
        %341 = sbr.rel (%p338) target = $region56
      $region55: #{tpu_custom_call.1} parent=5 // pred_region
        %s342 = ssub.s32 %s20, 1
        // Predicated region
        $region57: #{tpu_custom_call.1} parent=55 // pred_check
          %p343 = pneg %p146
        $region58: #{tpu_custom_call.1} parent=55 // pred_check_branch
          %345 = sbr.rel (%p343) target = $region60
        $region59: #{tpu_custom_call.1} parent=55 // pred_region
          %346 = dma.done [#allocation8], 4096
        $region60: #{tpu_custom_call.1} parent=55 // pred_fallthru
          _
        // Predicated region
        $region61: #{tpu_custom_call.1} parent=55 // pred_check
          %p347 = pneg %p209
        $region62: #{tpu_custom_call.1} parent=55 // pred_check_branch
          %349 = sbr.rel (%p347) target = $region64
        $region63: #{tpu_custom_call.1} parent=55 // pred_region
          %350 = dma.done [#allocation11], 4096
        $region64: #{tpu_custom_call.1} parent=55 // pred_fallthru
          _
        %p351 = scmp.eq.s32.totalorder %s29, 0
        %s352 = scalar_select %p351, %s30, 0
        %s353 = smul.u32 4, %s352
        %p354 = scmp.lt.s32.totalorder %s353, 15
        %s355 = scalar_select %p354, %s353, 15
        %s356 = smul.addr %s355, 4
        %s357 = scalar_lea.vmem %s0, %s356
        %p358 = pneg %p62
        %p359 = pneg %p59
        %p360 = pneg %p83
        %p361 = pneg %p80
        %p362 = pneg %p104
        %p363 = pneg %p101
        %p364 = pneg %p125
        %p365 = pneg %p122
        %p366 = pneg %p146
        %p367 = pneg %p143
        %p368 = pneg %p167
        %p369 = pneg %p164
        %p370 = pneg %p188
        %p371 = pneg %p185
        %p372 = pneg %p209
        %p373 = pneg %p206
        %p374 = pneg %p230
        %p375 = pneg %p227
        %p376 = pneg %p260
        %p377 = pneg %p257
        %s378 = sand.u32 %s247, 1
        %s379 = scalar_lea.sflag [#allocation9], %s378
        %s380 = sand.u32 %s247, 1
        %s381 = smul.addr %s380, 64
        %s382 = scalar_lea.vmem [#allocation12], %s381
        %p383 = scmp.eq.s32.totalorder %s29, 0
        %s384 = scalar_select %p383, %s30, 0
        %s385 = smul.u32 4, %s384
        %p386 = scmp.lt.s32.totalorder %s385, 15
        %s387 = scalar_select %p386, %s385, 15
        %s388 = smul.addr %s387, 4
        %s389 = scalar_lea.vmem %s0, %s388
        %p390 = scmp.eq.s32.totalorder %s29, 0
        %s391 = scalar_select %p390, %s30, 0
        %s392 = smul.u32 4, %s391
        %p393 = scmp.eq.s32.totalorder %s29, 2
        %s394 = scalar_select %p393, %s30, 0
        %s395 = smul.u32 4, %s394
        %s397 = smul.u32 %s30, 32
        %p398 = scmp.eq.s32.totalorder %s29, 0
        // Predicated region
        $region65: #{tpu_custom_call.1} parent=55 // pred_check
          %p399 = pneg %p398
        $region66: #{tpu_custom_call.1} parent=55 // pred_check_branch
          %401 = sbr.rel (%p399) target = $region68
        $region67: #{tpu_custom_call.1} parent=55 // pred_region
          %p402 = scmp.eq.s32.totalorder %s30, 0
          // Predicated region
          $region69: #{tpu_custom_call.1} parent=67 // pred_check
            %p403 = pneg %p402
          $region70: #{tpu_custom_call.1} parent=67 // pred_check_branch
            %405 = sbr.rel (%p403) target = $region72
          $region71: #{tpu_custom_call.1} parent=67 // pred_region
            %v406 = vlaneseq
            %vm407 = vcmp.ge.s32.totalorder %v406, 0
            %vm408 = vcmp.lt.s32.totalorder %v406, 256
            %vm409 = vmand %vm407, %vm408
            %410 = vst.msk [vmem:[#allocation3] sm:$0x3] %vm409, 0.0
            %411 = vst.msk [vmem:[#allocation4] sm:$0x3] %vm409, 0.0
          $region72: #{tpu_custom_call.1} parent=67 // pred_fallthru
            _
          %v412 = vld [vmem:[%s389] sm:$0xf]
          %v413 = vld [vmem:[%s389 + $0x4] sm:$0xf]
          %v414 = vld [vmem:[%s389 + $0x8] sm:$0xf]
          %v415 = vld [vmem:[%s389 + $0xc] sm:$0xf]
          %v416 = vld [vmem:[%s1] sm:$0xff]
          %v417 = vld [vmem:[%s1 + $0x8] sm:$0xff]
          %v418 = vld [vmem:[%s1 + $0x10] sm:$0xff]
          %v419 = vld [vmem:[%s1 + $0x18] sm:$0xff]
          %v420 = vld [vmem:[%s1 + $0x20] sm:$0xff]
          %v421 = vld [vmem:[%s1 + $0x28] sm:$0xff]
          %v422 = vld [vmem:[%s1 + $0x30] sm:$0xff]
          %v423 = vld [vmem:[%s1 + $0x38] sm:$0xff]
          %v428 = vunpack.c.l.b16 %v412
          %v429 = vunpack.c.l.b16 %v413
          %v430 = vunpack.c.l.b16 %v414
          %v431 = vunpack.c.l.b16 %v415
          %v432 = vpack.c.b16 %v429, %v428
          %v433 = vpack.c.b16 %v431, %v430
          %v442 = vunpack.c.l.b16 %v416
          %v443 = vunpack.c.h.b16 %v416
          %v444 = vunpack.c.l.b16 %v417
          %v445 = vunpack.c.h.b16 %v417
          %v446 = vunpack.c.l.b16 %v418
          %v447 = vunpack.c.h.b16 %v418
          %v448 = vunpack.c.l.b16 %v419
          %v449 = vunpack.c.h.b16 %v419
          %v450 = vunpack.c.l.b16 %v420
          %v451 = vunpack.c.h.b16 %v420
          %v452 = vunpack.c.l.b16 %v421
          %v453 = vunpack.c.h.b16 %v421
          %v454 = vunpack.c.l.b16 %v422
          %v455 = vunpack.c.h.b16 %v422
          %v456 = vunpack.c.l.b16 %v423
          %v457 = vunpack.c.h.b16 %v423
          %v458 = vpack.c.b16 %v444, %v442
          %v459 = vpack.c.b16 %v445, %v443
          %v460 = vpack.c.b16 %v448, %v446
          %v461 = vpack.c.b16 %v449, %v447
          %v462 = vpack.c.b16 %v452, %v450
          %v463 = vpack.c.b16 %v453, %v451
          %v464 = vpack.c.b16 %v456, %v454
          %v465 = vpack.c.b16 %v457, %v455
          %vm474 = vcmask 523264
          %v476 = vsel %vm474, %v432, 0
          %v479 = vsel %vm474, %v433, 0
          %481 = vmatprep.subr.bf16.mxu0 %v459
          %482 = vmatpush1.bf16.msra.mxu0 %v458
          %483 = vmatprep.subr.bf16.mxu0 %v461
          %484 = vmatpush1.bf16.msra.mxu0 %v460
          %485 = vmatprep.subr.bf16.mxu0 %v463
          %486 = vmatpush1.bf16.msra.mxu0 %v462
          %487 = vmatprep.subr.bf16.mxu0 %v465
          %488 = vmatpush1.bf16.msra.mxu0 %v464
          %489 = vmatprep.subr.bf16.mxu0 0
          %490 = vmatpush1.bf16.msra.mxu0 0
          %491 = vmatprep.subr.bf16.mxu0 0
          %492 = vmatpush1.bf16.msra.mxu0 0
          %493 = vmatprep.subr.bf16.mxu0 0
          %494 = vmatpush1.bf16.msra.mxu0 0
          %495 = vmatprep.subr.bf16.mxu0 0
          %496 = vmatpush1.bf16.msra.mxu0 0
          %497 = vmatprep.subr.bf16.mxu0 0
          %498 = vmatpush1.bf16.msra.mxu0 0
          %499 = vmatprep.subr.bf16.mxu0 0
          %500 = vmatpush1.bf16.msra.mxu0 0
          %501 = vmatprep.subr.bf16.mxu0 0
          %502 = vmatpush1.bf16.msra.mxu0 0
          %503 = vmatprep.subr.bf16.mxu0 0
          %504 = vmatpush1.bf16.msra.mxu0 0
          %505 = vmatprep.subr.bf16.mxu0 0
          %506 = vmatpush1.bf16.msra.mxu0 0
          %507 = vmatprep.subr.bf16.mxu0 0
          %508 = vmatpush1.bf16.msra.mxu0 0
          %509 = vmatprep.subr.bf16.mxu0 0
          %510 = vmatpush1.bf16.msra.mxu0 0
          %511 = vmatprep.subr.bf16.mxu0 0
          %512 = vmatpush1.bf16.msra.mxu0 0
          %513 = vmatprep.mubr.bf16.mxu0 0
          %514 = vmatmul.mubr.bf16.gmra.mrb[0].mxu0 %v476
          %v515 = vpop.f32.mrb[0].mxu0
          %v516 = vadd.f32 0.0, %v515
          %v517 = vpop.f32.mrb[0].mxu0
          %v518 = vadd.f32 0.0, %v517
          %v519 = vpop.f32.mrb[0].mxu0
          %v520 = vadd.f32 0.0, %v519
          %v521 = vpop.f32.mrb[0].mxu0
          %v522 = vadd.f32 0.0, %v521
          %523 = vmatprep.mubr.bf16.mxu0 0
          %524 = vmatmul.mubr.bf16.gmra.mrb[0].mxu0 %v479
          %v525 = vpop.f32.mrb[0].mxu0
          %v526 = vadd.f32 0.0, %v525
          %v527 = vpop.f32.mrb[0].mxu0
          %v528 = vadd.f32 0.0, %v527
          %v529 = vpop.f32.mrb[0].mxu0
          %v530 = vadd.f32 0.0, %v529
          %v531 = vpop.f32.mrb[0].mxu0
          %v532 = vadd.f32 0.0, %v531
          %533 = vdwg.mxu0
          %s534 = sshra.s32 %s397, 3
          %s535 = sand.u32 %s397, 7
          %s536 = smul.u32 %s534, 2
          %s537 = smul.addr %s536, 8
          %s538 = scalar_lea.vmem [#allocation2], %s537
          %539 = vst [vmem:[%s538] sm:$0xff] %v516
          %540 = vst [vmem:[%s538 + $0x8] sm:$0xff] %v518
          %541 = vst [vmem:[%s538 + $0x10] sm:$0xff] %v520
          %542 = vst [vmem:[%s538 + $0x18] sm:$0xff] %v522
          %543 = vst [vmem:[%s538 + $0x20] sm:$0xff] %v526
          %544 = vst [vmem:[%s538 + $0x28] sm:$0xff] %v528
          %545 = vst [vmem:[%s538 + $0x30] sm:$0xff] %v530
          %546 = vst [vmem:[%s538 + $0x38] sm:$0xff] %v532
          %v547 = vld [vmem:[#allocation3] sm:$0x3]
          %v548 = vadd.f32 %v516, %v520
          %v549 = vadd.f32 %v548, %v526
          %v550 = vadd.f32 %v549, %v530
          %v551 = vrot.slane %v550, 4
          %v552 = vadd.f32 %v550, %v551
          %v553 = vrot.slane %v552, 2
          %v554 = vadd.f32 %v552, %v553
          %v555 = vrot.slane %v554, 1
          %v556 = vadd.f32 %v554, %v555
          %v557 = vadd.f32 %v518, %v522
          %v558 = vadd.f32 %v557, %v528
          %v559 = vadd.f32 %v558, %v532
          %v560 = vrot.slane %v559, 4
          %v561 = vadd.f32 %v559, %v560
          %v562 = vrot.slane %v561, 2
          %v563 = vadd.f32 %v561, %v562
          %v564 = vrot.slane %v563, 1
          %v565 = vadd.f32 %v563, %v564
          %v568 = vcombine.low %v556, %v565
          %v570 = vunpack.c.l.s4 1966171168
          %v571 = vunpack.c.0.s8 %v570
          %v572 = vlaneseq
          %v573 = vshrl.u32 %v572, 7
          %v574 = vsub.s32 %v571, %v573
          %v575 = vrot.slane %v568, %v574
          %v577 = vunpack.c.l.s4 1966171168
          %v578 = vunpack.c.0.s8 %v577
          %v579 = vlaneseq
          %v580 = vshrl.u32 %v579, 7
          %v581 = vsub.s32 %v578, %v580
          %v582 = vrot.slane %v575, %v581
          %v584 = vadd.f32 %v547, %v582
          %v585 = vlaneseq
          %vm586 = vcmp.ge.s32.totalorder %v585, 0
          %vm587 = vcmp.lt.s32.totalorder %v585, 256
          %vm588 = vmand %vm586, %vm587
          %589 = vst.msk [vmem:[#allocation3] sm:$0x3] %vm588, %v584
          %v590 = vld [vmem:[#allocation4] sm:$0x3]
          %v591 = vmul.f32 %v516, %v516
          %v592 = vmul.f32 %v518, %v518
          %v593 = vmul.f32 %v520, %v520
          %v594 = vmul.f32 %v522, %v522
          %v595 = vmul.f32 %v526, %v526
          %v596 = vmul.f32 %v528, %v528
          %v597 = vmul.f32 %v530, %v530
          %v598 = vmul.f32 %v532, %v532
          %v599 = vadd.f32 %v591, %v593
          %v600 = vadd.f32 %v599, %v595
          %v601 = vadd.f32 %v600, %v597
          %v602 = vrot.slane %v601, 4
          %v603 = vadd.f32 %v601, %v602
          %v604 = vrot.slane %v603, 2
          %v605 = vadd.f32 %v603, %v604
          %v606 = vrot.slane %v605, 1
          %v607 = vadd.f32 %v605, %v606
          %v608 = vadd.f32 %v592, %v594
          %v609 = vadd.f32 %v608, %v596
          %v610 = vadd.f32 %v609, %v598
          %v611 = vrot.slane %v610, 4
          %v612 = vadd.f32 %v610, %v611
          %v613 = vrot.slane %v612, 2
          %v614 = vadd.f32 %v612, %v613
          %v615 = vrot.slane %v614, 1
          %v616 = vadd.f32 %v614, %v615
          %v619 = vcombine.low %v607, %v616
          %v621 = vunpack.c.l.s4 1966171168
          %v622 = vunpack.c.0.s8 %v621
          %v623 = vlaneseq
          %v624 = vshrl.u32 %v623, 7
          %v625 = vsub.s32 %v622, %v624
          %v626 = vrot.slane %v619, %v625
          %v628 = vunpack.c.l.s4 1966171168
          %v629 = vunpack.c.0.s8 %v628
          %v630 = vlaneseq
          %v631 = vshrl.u32 %v630, 7
          %v632 = vsub.s32 %v629, %v631
          %v633 = vrot.slane %v626, %v632
          %v635 = vadd.f32 %v590, %v633
          %636 = vst.msk [vmem:[#allocation4] sm:$0x3] %vm588, %v635
        $region68: #{tpu_custom_call.1} parent=55 // pred_fallthru
          _
        %p637 = scmp.eq.s32.totalorder %s29, 1
        // Predicated region
        $region73: #{tpu_custom_call.1} parent=55 // pred_check
          %p638 = pneg %p637
        $region74: #{tpu_custom_call.1} parent=55 // pred_check_branch
          %640 = sbr.rel (%p638) target = $region76
        $region75: #{tpu_custom_call.1} parent=55 // pred_region
          %p641 = scmp.eq.s32.totalorder %s30, 0
          // Predicated region
          $region77: #{tpu_custom_call.1} parent=75 // pred_check
            %p642 = pneg %p641
          $region78: #{tpu_custom_call.1} parent=75 // pred_check_branch
            %644 = sbr.rel (%p642) target = $region80
          $region79: #{tpu_custom_call.1} parent=75 // pred_region
            %v645 = vld [vmem:[%s2] sm:$0x3]
            %v646 = vld [vmem:[%s3] sm:$0x3]
            %v647 = vld [vmem:[#allocation3] sm:$0x3]
            %v648 = vmul.f32 %v647, 0.0078125
            %v649 = vld [vmem:[#allocation4] sm:$0x3]
            %v650 = vmul.f32 %v649, 0.0078125
            %v651 = vmul.f32 %v648, %v648
            %v652 = vsub.f32 %v650, %v651
            %v653 = vmax.f32 %v652, 0.0
            %v654 = vadd.f32 %v653, 1e-05
            %v655 = vrsqrt.pop %v654
            %v656 = vmul.f32 %v645, %v655
            %v657 = vmul.f32 %v648, %v656
            %v658 = vsub.f32 %v646, %v657
            %v659 = vlaneseq
            %vm660 = vcmp.ge.s32.totalorder %v659, 0
            %vm661 = vcmp.lt.s32.totalorder %v659, 256
            %vm662 = vmand %vm660, %vm661
            %663 = vst.msk [vmem:[#allocation5] sm:$0x3] %vm662, %v656
            %664 = vst.msk [vmem:[#allocation6] sm:$0x3] %vm662, %v658
            %665 = vst.msk [vmem:[#allocation3] sm:$0x3] %vm662, 0.0
            %666 = vst.msk [vmem:[#allocation4] sm:$0x3] %vm662, 0.0
          $region80: #{tpu_custom_call.1} parent=75 // pred_fallthru
            _
          %s667 = sshra.s32 %s397, 3
          %s668 = sand.u32 %s397, 7
          %s669 = smul.u32 %s667, 2
          %s670 = smul.addr %s669, 8
          %s671 = scalar_lea.vmem [#allocation2], %s670
          %v672 = vld [vmem:[%s671] sm:$0xff]
          %v673 = vld [vmem:[%s671 + $0x8] sm:$0xff]
          %v674 = vld [vmem:[%s671 + $0x10] sm:$0xff]
          %v675 = vld [vmem:[%s671 + $0x18] sm:$0xff]
          %v676 = vld [vmem:[%s671 + $0x20] sm:$0xff]
          %v677 = vld [vmem:[%s671 + $0x28] sm:$0xff]
          %v678 = vld [vmem:[%s671 + $0x30] sm:$0xff]
          %v679 = vld [vmem:[%s671 + $0x38] sm:$0xff]
          %v680 = vld [vmem:[#allocation5] sm:$0x3]
          %v682 = vlaneseq
          %v683 = vshrl.u32 %v682, 7
          %v684 = vsub.s32 0, %v683
          %v685 = vrot.slane %v680, %v684
          %v686 = vlaneseq
          %v687 = vshrl.u32 %v686, 7
          %v688 = vsub.s32 1, %v687
          %v689 = vrot.slane %v680, %v688
          %v692 = vmul.f32 %v672, %v685
          %v693 = vmul.f32 %v673, %v689
          %v694 = vmul.f32 %v674, %v685
          %v695 = vmul.f32 %v675, %v689
          %v696 = vmul.f32 %v676, %v685
          %v697 = vmul.f32 %v677, %v689
          %v698 = vmul.f32 %v678, %v685
          %v699 = vmul.f32 %v679, %v689
          %v700 = vld [vmem:[#allocation6] sm:$0x3]
          %v702 = vlaneseq
          %v703 = vshrl.u32 %v702, 7
          %v704 = vsub.s32 0, %v703
          %v705 = vrot.slane %v700, %v704
          %v706 = vlaneseq
          %v707 = vshrl.u32 %v706, 7
          %v708 = vsub.s32 1, %v707
          %v709 = vrot.slane %v700, %v708
          %v712 = vadd.f32 %v692, %v705
          %v713 = vadd.f32 %v693, %v709
          %v714 = vadd.f32 %v694, %v705
          %v715 = vadd.f32 %v695, %v709
          %v716 = vadd.f32 %v696, %v705
          %v717 = vadd.f32 %v697, %v709
          %v718 = vadd.f32 %v698, %v705
          %v719 = vadd.f32 %v699, %v709
          %v720 = vmax.f32 %v712, 0.0
          %v721 = vmax.f32 %v713, 0.0
          %v722 = vmax.f32 %v714, 0.0
          %v723 = vmax.f32 %v715, 0.0
          %v724 = vmax.f32 %v716, 0.0
          %v725 = vmax.f32 %v717, 0.0
          %v726 = vmax.f32 %v718, 0.0
          %v727 = vmax.f32 %v719, 0.0
          %v728 = vpack.c.bf16 %v722, %v720
          %v729 = vpack.c.bf16 %v723, %v721
          %v730 = vpack.c.bf16 %v726, %v724
          %v731 = vpack.c.bf16 %v727, %v725
          %v732 = vld [vmem:[#allocation7] sm:$0xff]
          %v733 = vld [vmem:[#allocation7 + $0x8] sm:$0xff]
          %v734 = vld [vmem:[#allocation7 + $0x10] sm:$0xff]
          %v735 = vld [vmem:[#allocation7 + $0x18] sm:$0xff]
          %v736 = vld [vmem:[#allocation7 + $0x20] sm:$0xff]
          %v737 = vld [vmem:[#allocation7 + $0x28] sm:$0xff]
          %v738 = vld [vmem:[#allocation7 + $0x30] sm:$0xff]
          %v739 = vld [vmem:[#allocation7 + $0x38] sm:$0xff]
          %v740 = vld [vmem:[#allocation7 + $0x40] sm:$0xff]
          %v741 = vld [vmem:[#allocation7 + $0x48] sm:$0xff]
          %v742 = vld [vmem:[#allocation7 + $0x50] sm:$0xff]
          %v743 = vld [vmem:[#allocation7 + $0x58] sm:$0xff]
          %v744 = vld [vmem:[#allocation7 + $0x60] sm:$0xff]
          %v745 = vld [vmem:[#allocation7 + $0x68] sm:$0xff]
          %v746 = vld [vmem:[#allocation7 + $0x70] sm:$0xff]
          %v747 = vld [vmem:[#allocation7 + $0x78] sm:$0xff]
          %v748 = vld [vmem:[#allocation7 + $0x80] sm:$0xff]
          %v749 = vld [vmem:[#allocation7 + $0x88] sm:$0xff]
          %v750 = vld [vmem:[#allocation7 + $0x90] sm:$0xff]
          %v751 = vld [vmem:[#allocation7 + $0x98] sm:$0xff]
          %v752 = vld [vmem:[#allocation7 + $0xa0] sm:$0xff]
          %v753 = vld [vmem:[#allocation7 + $0xa8] sm:$0xff]
          %v754 = vld [vmem:[#allocation7 + $0xb0] sm:$0xff]
          %v755 = vld [vmem:[#allocation7 + $0xb8] sm:$0xff]
          %v756 = vld [vmem:[#allocation7 + $0xc0] sm:$0xff]
          %v757 = vld [vmem:[#allocation7 + $0xc8] sm:$0xff]
          %v758 = vld [vmem:[#allocation7 + $0xd0] sm:$0xff]
          %v759 = vld [vmem:[#allocation7 + $0xd8] sm:$0xff]
          %v760 = vld [vmem:[#allocation7 + $0xe0] sm:$0xff]
          %v761 = vld [vmem:[#allocation7 + $0xe8] sm:$0xff]
          %v762 = vld [vmem:[#allocation7 + $0xf0] sm:$0xff]
          %v763 = vld [vmem:[#allocation7 + $0xf8] sm:$0xff]
          %v796 = vunpack.c.l.b16 %v732
          %v797 = vunpack.c.h.b16 %v732
          %v798 = vunpack.c.l.b16 %v733
          %v799 = vunpack.c.h.b16 %v733
          %v800 = vunpack.c.l.b16 %v734
          %v801 = vunpack.c.h.b16 %v734
          %v802 = vunpack.c.l.b16 %v735
          %v803 = vunpack.c.h.b16 %v735
          %v804 = vunpack.c.l.b16 %v736
          %v805 = vunpack.c.h.b16 %v736
          %v806 = vunpack.c.l.b16 %v737
          %v807 = vunpack.c.h.b16 %v737
          %v808 = vunpack.c.l.b16 %v738
          %v809 = vunpack.c.h.b16 %v738
          %v810 = vunpack.c.l.b16 %v739
          %v811 = vunpack.c.h.b16 %v739
          %v812 = vunpack.c.l.b16 %v740
          %v813 = vunpack.c.h.b16 %v740
          %v814 = vunpack.c.l.b16 %v741
          %v815 = vunpack.c.h.b16 %v741
          %v816 = vunpack.c.l.b16 %v742
          %v817 = vunpack.c.h.b16 %v742
          %v818 = vunpack.c.l.b16 %v743
          %v819 = vunpack.c.h.b16 %v743
          %v820 = vunpack.c.l.b16 %v744
          %v821 = vunpack.c.h.b16 %v744
          %v822 = vunpack.c.l.b16 %v745
          %v823 = vunpack.c.h.b16 %v745
          %v824 = vunpack.c.l.b16 %v746
          %v825 = vunpack.c.h.b16 %v746
          %v826 = vunpack.c.l.b16 %v747
          %v827 = vunpack.c.h.b16 %v747
          %v828 = vunpack.c.l.b16 %v748
          %v829 = vunpack.c.h.b16 %v748
          %v830 = vunpack.c.l.b16 %v749
          %v831 = vunpack.c.h.b16 %v749
          %v832 = vunpack.c.l.b16 %v750
          %v833 = vunpack.c.h.b16 %v750
          %v834 = vunpack.c.l.b16 %v751
          %v835 = vunpack.c.h.b16 %v751
          %v836 = vunpack.c.l.b16 %v752
          %v837 = vunpack.c.h.b16 %v752
          %v838 = vunpack.c.l.b16 %v753
          %v839 = vunpack.c.h.b16 %v753
          %v840 = vunpack.c.l.b16 %v754
          %v841 = vunpack.c.h.b16 %v754
          %v842 = vunpack.c.l.b16 %v755
          %v843 = vunpack.c.h.b16 %v755
          %v844 = vunpack.c.l.b16 %v756
          %v845 = vunpack.c.h.b16 %v756
          %v846 = vunpack.c.l.b16 %v757
          %v847 = vunpack.c.h.b16 %v757
          %v848 = vunpack.c.l.b16 %v758
          %v849 = vunpack.c.h.b16 %v758
          %v850 = vunpack.c.l.b16 %v759
          %v851 = vunpack.c.h.b16 %v759
          %v852 = vunpack.c.l.b16 %v760
          %v853 = vunpack.c.h.b16 %v760
          %v854 = vunpack.c.l.b16 %v761
          %v855 = vunpack.c.h.b16 %v761
          %v856 = vunpack.c.l.b16 %v762
          %v857 = vunpack.c.h.b16 %v762
          %v858 = vunpack.c.l.b16 %v763
          %v859 = vunpack.c.h.b16 %v763
          %v860 = vpack.c.b16 %v798, %v796
          %v861 = vpack.c.b16 %v799, %v797
          %v862 = vpack.c.b16 %v802, %v800
          %v863 = vpack.c.b16 %v803, %v801
          %v864 = vpack.c.b16 %v806, %v804
          %v865 = vpack.c.b16 %v807, %v805
          %v866 = vpack.c.b16 %v810, %v808
          %v867 = vpack.c.b16 %v811, %v809
          %v868 = vpack.c.b16 %v814, %v812
          %v869 = vpack.c.b16 %v815, %v813
          %v870 = vpack.c.b16 %v818, %v816
          %v871 = vpack.c.b16 %v819, %v817
          %v872 = vpack.c.b16 %v822, %v820
          %v873 = vpack.c.b16 %v823, %v821
          %v874 = vpack.c.b16 %v826, %v824
          %v875 = vpack.c.b16 %v827, %v825
          %v876 = vpack.c.b16 %v830, %v828
          %v877 = vpack.c.b16 %v831, %v829
          %v878 = vpack.c.b16 %v834, %v832
          %v879 = vpack.c.b16 %v835, %v833
          %v880 = vpack.c.b16 %v838, %v836
          %v881 = vpack.c.b16 %v839, %v837
          %v882 = vpack.c.b16 %v842, %v840
          %v883 = vpack.c.b16 %v843, %v841
          %v884 = vpack.c.b16 %v846, %v844
          %v885 = vpack.c.b16 %v847, %v845
          %v886 = vpack.c.b16 %v850, %v848
          %v887 = vpack.c.b16 %v851, %v849
          %v888 = vpack.c.b16 %v854, %v852
          %v889 = vpack.c.b16 %v855, %v853
          %v890 = vpack.c.b16 %v858, %v856
          %v891 = vpack.c.b16 %v859, %v857
          %924 = vmatprep.subr.bf16.mxu0 %v861
          %925 = vmatpush1.bf16.msra.mxu0 %v860
          %926 = vmatprep.subr.bf16.mxu0 %v863
          %927 = vmatpush1.bf16.msra.mxu0 %v862
          %928 = vmatprep.subr.bf16.mxu0 %v865
          %929 = vmatpush1.bf16.msra.mxu0 %v864
          %930 = vmatprep.subr.bf16.mxu0 %v867
          %931 = vmatpush1.bf16.msra.mxu0 %v866
          %932 = vmatprep.subr.bf16.mxu0 %v869
          %933 = vmatpush1.bf16.msra.mxu0 %v868
          %934 = vmatprep.subr.bf16.mxu0 %v871
          %935 = vmatpush1.bf16.msra.mxu0 %v870
          %936 = vmatprep.subr.bf16.mxu0 %v873
          %937 = vmatpush1.bf16.msra.mxu0 %v872
          %938 = vmatprep.subr.bf16.mxu0 %v875
          %939 = vmatpush1.bf16.msra.mxu0 %v874
          %940 = vmatprep.subr.bf16.mxu0 %v877
          %941 = vmatpush1.bf16.msra.mxu0 %v876
          %942 = vmatprep.subr.bf16.mxu0 %v879
          %943 = vmatpush1.bf16.msra.mxu0 %v878
          %944 = vmatprep.subr.bf16.mxu0 %v881
          %945 = vmatpush1.bf16.msra.mxu0 %v880
          %946 = vmatprep.subr.bf16.mxu0 %v883
          %947 = vmatpush1.bf16.msra.mxu0 %v882
          %948 = vmatprep.subr.bf16.mxu0 %v885
          %949 = vmatpush1.bf16.msra.mxu0 %v884
          %950 = vmatprep.subr.bf16.mxu0 %v887
          %951 = vmatpush1.bf16.msra.mxu0 %v886
          %952 = vmatprep.subr.bf16.mxu0 %v889
          %953 = vmatpush1.bf16.msra.mxu0 %v888
          %954 = vmatprep.subr.bf16.mxu0 %v891
          %955 = vmatpush1.bf16.msra.mxu0 %v890
          %956 = vmatprep.mubr.bf16.mxu0 %v729
          %957 = vmatmul.mubr.bf16.gmra.mrb[0].mxu0 %v728
          %v958 = vpop.f32.mrb[0].mxu0
          %v959 = vadd.f32 0.0, %v958
          %v960 = vpop.f32.mrb[0].mxu0
          %v961 = vadd.f32 0.0, %v960
          %v962 = vpop.f32.mrb[0].mxu0
          %v963 = vadd.f32 0.0, %v962
          %v964 = vpop.f32.mrb[0].mxu0
          %v965 = vadd.f32 0.0, %v964
          %966 = vmatprep.mubr.bf16.mxu0 %v731
          %967 = vmatmul.mubr.bf16.gmra.mrb[0].mxu0 %v730
          %v968 = vpop.f32.mrb[0].mxu0
          %v969 = vadd.f32 0.0, %v968
          %v970 = vpop.f32.mrb[0].mxu0
          %v971 = vadd.f32 0.0, %v970
          %v972 = vpop.f32.mrb[0].mxu0
          %v973 = vadd.f32 0.0, %v972
          %v974 = vpop.f32.mrb[0].mxu0
          %v975 = vadd.f32 0.0, %v974
          %976 = vdwg.mxu0
          %977 = vst [vmem:[%s671] sm:$0xff] %v959
          %978 = vst [vmem:[%s671 + $0x8] sm:$0xff] %v961
          %979 = vst [vmem:[%s671 + $0x10] sm:$0xff] %v963
          %980 = vst [vmem:[%s671 + $0x18] sm:$0xff] %v965
          %981 = vst [vmem:[%s671 + $0x20] sm:$0xff] %v969
          %982 = vst [vmem:[%s671 + $0x28] sm:$0xff] %v971
          %983 = vst [vmem:[%s671 + $0x30] sm:$0xff] %v973
          %984 = vst [vmem:[%s671 + $0x38] sm:$0xff] %v975
          %v985 = vld [vmem:[#allocation3] sm:$0x3]
          %v986 = vadd.f32 %v959, %v963
          %v987 = vadd.f32 %v986, %v969
          %v988 = vadd.f32 %v987, %v973
          %v989 = vrot.slane %v988, 4
          %v990 = vadd.f32 %v988, %v989
          %v991 = vrot.slane %v990, 2
          %v992 = vadd.f32 %v990, %v991
          %v993 = vrot.slane %v992, 1
          %v994 = vadd.f32 %v992, %v993
          %v995 = vadd.f32 %v961, %v965
          %v996 = vadd.f32 %v995, %v971
          %v997 = vadd.f32 %v996, %v975
          %v998 = vrot.slane %v997, 4
          %v999 = vadd.f32 %v997, %v998
          %v1000 = vrot.slane %v999, 2
          %v1001 = vadd.f32 %v999, %v1000
          %v1002 = vrot.slane %v1001, 1
          %v1003 = vadd.f32 %v1001, %v1002
          %v1006 = vcombine.low %v994, %v1003
          %v1008 = vunpack.c.l.s4 1966171168
          %v1009 = vunpack.c.0.s8 %v1008
          %v1010 = vlaneseq
          %v1011 = vshrl.u32 %v1010, 7
          %v1012 = vsub.s32 %v1009, %v1011
          %v1013 = vrot.slane %v1006, %v1012
          %v1015 = vunpack.c.l.s4 1966171168
          %v1016 = vunpack.c.0.s8 %v1015
          %v1017 = vlaneseq
          %v1018 = vshrl.u32 %v1017, 7
          %v1019 = vsub.s32 %v1016, %v1018
          %v1020 = vrot.slane %v1013, %v1019
          %v1022 = vadd.f32 %v985, %v1020
          %v1023 = vlaneseq
          %vm1024 = vcmp.ge.s32.totalorder %v1023, 0
          %vm1025 = vcmp.lt.s32.totalorder %v1023, 256
          %vm1026 = vmand %vm1024, %vm1025
          %1027 = vst.msk [vmem:[#allocation3] sm:$0x3] %vm1026, %v1022
          %v1028 = vld [vmem:[#allocation4] sm:$0x3]
          %v1029 = vmul.f32 %v959, %v959
          %v1030 = vmul.f32 %v961, %v961
          %v1031 = vmul.f32 %v963, %v963
          %v1032 = vmul.f32 %v965, %v965
          %v1033 = vmul.f32 %v969, %v969
          %v1034 = vmul.f32 %v971, %v971
          %v1035 = vmul.f32 %v973, %v973
          %v1036 = vmul.f32 %v975, %v975
          %v1037 = vadd.f32 %v1029, %v1031
          %v1038 = vadd.f32 %v1037, %v1033
          %v1039 = vadd.f32 %v1038, %v1035
          %v1040 = vrot.slane %v1039, 4
          %v1041 = vadd.f32 %v1039, %v1040
          %v1042 = vrot.slane %v1041, 2
          %v1043 = vadd.f32 %v1041, %v1042
          %v1044 = vrot.slane %v1043, 1
          %v1045 = vadd.f32 %v1043, %v1044
          %v1046 = vadd.f32 %v1030, %v1032
          %v1047 = vadd.f32 %v1046, %v1034
          %v1048 = vadd.f32 %v1047, %v1036
          %v1049 = vrot.slane %v1048, 4
          %v1050 = vadd.f32 %v1048, %v1049
          %v1051 = vrot.slane %v1050, 2
          %v1052 = vadd.f32 %v1050, %v1051
          %v1053 = vrot.slane %v1052, 1
          %v1054 = vadd.f32 %v1052, %v1053
          %v1057 = vcombine.low %v1045, %v1054
          %v1059 = vunpack.c.l.s4 1966171168
          %v1060 = vunpack.c.0.s8 %v1059
          %v1061 = vlaneseq
          %v1062 = vshrl.u32 %v1061, 7
          %v1063 = vsub.s32 %v1060, %v1062
          %v1064 = vrot.slane %v1057, %v1063
          %v1066 = vunpack.c.l.s4 1966171168
          %v1067 = vunpack.c.0.s8 %v1066
          %v1068 = vlaneseq
          %v1069 = vshrl.u32 %v1068, 7
          %v1070 = vsub.s32 %v1067, %v1069
          %v1071 = vrot.slane %v1064, %v1070
          %v1073 = vadd.f32 %v1028, %v1071
          %1074 = vst.msk [vmem:[#allocation4] sm:$0x3] %vm1026, %v1073
        $region76: #{tpu_custom_call.1} parent=55 // pred_fallthru
          _
        %p1075 = scmp.eq.s32.totalorder %s29, 2
        // Predicated region
        $region81: #{tpu_custom_call.1} parent=55 // pred_check
          %p1076 = pneg %p1075
        $region82: #{tpu_custom_call.1} parent=55 // pred_check_branch
          %1078 = sbr.rel (%p1076) target = $region84
        $region83: #{tpu_custom_call.1} parent=55 // pred_region
          %p1079 = scmp.eq.s32.totalorder %s30, 0
          // Predicated region
          $region85: #{tpu_custom_call.1} parent=83 // pred_check
            %p1080 = pneg %p1079
          $region86: #{tpu_custom_call.1} parent=83 // pred_check_branch
            %1082 = sbr.rel (%p1080) target = $region88
          $region87: #{tpu_custom_call.1} parent=83 // pred_region
            %v1083 = vld [vmem:[%s5] sm:$0x3]
            %v1084 = vld [vmem:[%s6] sm:$0x3]
            %v1085 = vld [vmem:[#allocation3] sm:$0x3]
            %v1086 = vmul.f32 %v1085, 0.0078125
            %v1087 = vld [vmem:[#allocation4] sm:$0x3]
            %v1088 = vmul.f32 %v1087, 0.0078125
            %v1089 = vmul.f32 %v1086, %v1086
            %v1090 = vsub.f32 %v1088, %v1089
            %v1091 = vmax.f32 %v1090, 0.0
            %v1092 = vadd.f32 %v1091, 1e-05
            %v1093 = vrsqrt.pop %v1092
            %v1094 = vmul.f32 %v1083, %v1093
            %v1095 = vmul.f32 %v1086, %v1094
            %v1096 = vsub.f32 %v1084, %v1095
            %v1097 = vlaneseq
            %vm1098 = vcmp.ge.s32.totalorder %v1097, 0
            %vm1099 = vcmp.lt.s32.totalorder %v1097, 256
            %vm1100 = vmand %vm1098, %vm1099
            %1101 = vst.msk [vmem:[#allocation5] sm:$0x3] %vm1100, %v1094
            %1102 = vst.msk [vmem:[#allocation6] sm:$0x3] %vm1100, %v1096
          $region88: #{tpu_custom_call.1} parent=83 // pred_fallthru
            _
          %s1103 = sshra.s32 %s397, 3
          %s1104 = sand.u32 %s397, 7
          %s1105 = smul.u32 %s1103, 2
          %s1106 = smul.addr %s1105, 8
          %s1107 = scalar_lea.vmem [#allocation2], %s1106
          %v1108 = vld [vmem:[%s1107] sm:$0xff]
          %v1109 = vld [vmem:[%s1107 + $0x8] sm:$0xff]
          %v1110 = vld [vmem:[%s1107 + $0x10] sm:$0xff]
          %v1111 = vld [vmem:[%s1107 + $0x18] sm:$0xff]
          %v1112 = vld [vmem:[%s1107 + $0x20] sm:$0xff]
          %v1113 = vld [vmem:[%s1107 + $0x28] sm:$0xff]
          %v1114 = vld [vmem:[%s1107 + $0x30] sm:$0xff]
          %v1115 = vld [vmem:[%s1107 + $0x38] sm:$0xff]
          %v1116 = vld [vmem:[#allocation5] sm:$0x3]
          %v1118 = vlaneseq
          %v1119 = vshrl.u32 %v1118, 7
          %v1120 = vsub.s32 0, %v1119
          %v1121 = vrot.slane %v1116, %v1120
          %v1122 = vlaneseq
          %v1123 = vshrl.u32 %v1122, 7
          %v1124 = vsub.s32 1, %v1123
          %v1125 = vrot.slane %v1116, %v1124
          %v1128 = vmul.f32 %v1108, %v1121
          %v1129 = vmul.f32 %v1109, %v1125
          %v1130 = vmul.f32 %v1110, %v1121
          %v1131 = vmul.f32 %v1111, %v1125
          %v1132 = vmul.f32 %v1112, %v1121
          %v1133 = vmul.f32 %v1113, %v1125
          %v1134 = vmul.f32 %v1114, %v1121
          %v1135 = vmul.f32 %v1115, %v1125
          %v1136 = vld [vmem:[#allocation6] sm:$0x3]
          %v1138 = vlaneseq
          %v1139 = vshrl.u32 %v1138, 7
          %v1140 = vsub.s32 0, %v1139
          %v1141 = vrot.slane %v1136, %v1140
          %v1142 = vlaneseq
          %v1143 = vshrl.u32 %v1142, 7
          %v1144 = vsub.s32 1, %v1143
          %v1145 = vrot.slane %v1136, %v1144
          %v1148 = vadd.f32 %v1128, %v1141
          %v1149 = vadd.f32 %v1129, %v1145
          %v1150 = vadd.f32 %v1130, %v1141
          %v1151 = vadd.f32 %v1131, %v1145
          %v1152 = vadd.f32 %v1132, %v1141
          %v1153 = vadd.f32 %v1133, %v1145
          %v1154 = vadd.f32 %v1134, %v1141
          %v1155 = vadd.f32 %v1135, %v1145
          %v1156 = vmax.f32 %v1148, 0.0
          %v1157 = vmax.f32 %v1149, 0.0
          %v1158 = vmax.f32 %v1150, 0.0
          %v1159 = vmax.f32 %v1151, 0.0
          %v1160 = vmax.f32 %v1152, 0.0
          %v1161 = vmax.f32 %v1153, 0.0
          %v1162 = vmax.f32 %v1154, 0.0
          %v1163 = vmax.f32 %v1155, 0.0
          %v1164 = vpack.c.bf16 %v1158, %v1156
          %v1165 = vpack.c.bf16 %v1159, %v1157
          %v1166 = vpack.c.bf16 %v1162, %v1160
          %v1167 = vpack.c.bf16 %v1163, %v1161
          %v1168 = vld [vmem:[#allocation10] sm:$0xff]
          %v1169 = vld [vmem:[#allocation10 + $0x8] sm:$0xff]
          %v1170 = vld [vmem:[#allocation10 + $0x10] sm:$0xff]
          %v1171 = vld [vmem:[#allocation10 + $0x18] sm:$0xff]
          %v1172 = vld [vmem:[#allocation10 + $0x20] sm:$0xff]
          %v1173 = vld [vmem:[#allocation10 + $0x28] sm:$0xff]
          %v1174 = vld [vmem:[#allocation10 + $0x30] sm:$0xff]
          %v1175 = vld [vmem:[#allocation10 + $0x38] sm:$0xff]
          %v1176 = vld [vmem:[#allocation10 + $0x40] sm:$0xff]
          %v1177 = vld [vmem:[#allocation10 + $0x48] sm:$0xff]
          %v1178 = vld [vmem:[#allocation10 + $0x50] sm:$0xff]
          %v1179 = vld [vmem:[#allocation10 + $0x58] sm:$0xff]
          %v1180 = vld [vmem:[#allocation10 + $0x60] sm:$0xff]
          %v1181 = vld [vmem:[#allocation10 + $0x68] sm:$0xff]
          %v1182 = vld [vmem:[#allocation10 + $0x70] sm:$0xff]
          %v1183 = vld [vmem:[#allocation10 + $0x78] sm:$0xff]
          %v1184 = vld [vmem:[#allocation10 + $0x80] sm:$0xff]
          %v1185 = vld [vmem:[#allocation10 + $0x88] sm:$0xff]
          %v1186 = vld [vmem:[#allocation10 + $0x90] sm:$0xff]
          %v1187 = vld [vmem:[#allocation10 + $0x98] sm:$0xff]
          %v1188 = vld [vmem:[#allocation10 + $0xa0] sm:$0xff]
          %v1189 = vld [vmem:[#allocation10 + $0xa8] sm:$0xff]
          %v1190 = vld [vmem:[#allocation10 + $0xb0] sm:$0xff]
          %v1191 = vld [vmem:[#allocation10 + $0xb8] sm:$0xff]
          %v1192 = vld [vmem:[#allocation10 + $0xc0] sm:$0xff]
          %v1193 = vld [vmem:[#allocation10 + $0xc8] sm:$0xff]
          %v1194 = vld [vmem:[#allocation10 + $0xd0] sm:$0xff]
          %v1195 = vld [vmem:[#allocation10 + $0xd8] sm:$0xff]
          %v1196 = vld [vmem:[#allocation10 + $0xe0] sm:$0xff]
          %v1197 = vld [vmem:[#allocation10 + $0xe8] sm:$0xff]
          %v1198 = vld [vmem:[#allocation10 + $0xf0] sm:$0xff]
          %v1199 = vld [vmem:[#allocation10 + $0xf8] sm:$0xff]
          %v1200 = vld [vmem:[%s8] sm:$0x3]
          %v1202 = vlaneseq
          %v1203 = vshrl.u32 %v1202, 7
          %v1204 = vsub.s32 0, %v1203
          %v1205 = vrot.slane %v1200, %v1204
          %v1206 = vlaneseq
          %v1207 = vshrl.u32 %v1206, 7
          %v1208 = vsub.s32 1, %v1207
          %v1209 = vrot.slane %v1200, %v1208
          %v1244 = vunpack.c.l.b16 %v1168
          %v1245 = vunpack.c.h.b16 %v1168
          %v1246 = vunpack.c.l.b16 %v1169
          %v1247 = vunpack.c.h.b16 %v1169
          %v1248 = vunpack.c.l.b16 %v1170
          %v1249 = vunpack.c.h.b16 %v1170
          %v1250 = vunpack.c.l.b16 %v1171
          %v1251 = vunpack.c.h.b16 %v1171
          %v1252 = vunpack.c.l.b16 %v1172
          %v1253 = vunpack.c.h.b16 %v1172
          %v1254 = vunpack.c.l.b16 %v1173
          %v1255 = vunpack.c.h.b16 %v1173
          %v1256 = vunpack.c.l.b16 %v1174
          %v1257 = vunpack.c.h.b16 %v1174
          %v1258 = vunpack.c.l.b16 %v1175
          %v1259 = vunpack.c.h.b16 %v1175
          %v1260 = vunpack.c.l.b16 %v1176
          %v1261 = vunpack.c.h.b16 %v1176
          %v1262 = vunpack.c.l.b16 %v1177
          %v1263 = vunpack.c.h.b16 %v1177
          %v1264 = vunpack.c.l.b16 %v1178
          %v1265 = vunpack.c.h.b16 %v1178
          %v1266 = vunpack.c.l.b16 %v1179
          %v1267 = vunpack.c.h.b16 %v1179
          %v1268 = vunpack.c.l.b16 %v1180
          %v1269 = vunpack.c.h.b16 %v1180
          %v1270 = vunpack.c.l.b16 %v1181
          %v1271 = vunpack.c.h.b16 %v1181
          %v1272 = vunpack.c.l.b16 %v1182
          %v1273 = vunpack.c.h.b16 %v1182
          %v1274 = vunpack.c.l.b16 %v1183
          %v1275 = vunpack.c.h.b16 %v1183
          %v1276 = vunpack.c.l.b16 %v1184
          %v1277 = vunpack.c.h.b16 %v1184
          %v1278 = vunpack.c.l.b16 %v1185
          %v1279 = vunpack.c.h.b16 %v1185
          %v1280 = vunpack.c.l.b16 %v1186
          %v1281 = vunpack.c.h.b16 %v1186
          %v1282 = vunpack.c.l.b16 %v1187
          %v1283 = vunpack.c.h.b16 %v1187
          %v1284 = vunpack.c.l.b16 %v1188
          %v1285 = vunpack.c.h.b16 %v1188
          %v1286 = vunpack.c.l.b16 %v1189
          %v1287 = vunpack.c.h.b16 %v1189
          %v1288 = vunpack.c.l.b16 %v1190
          %v1289 = vunpack.c.h.b16 %v1190
          %v1290 = vunpack.c.l.b16 %v1191
          %v1291 = vunpack.c.h.b16 %v1191
          %v1292 = vunpack.c.l.b16 %v1192
          %v1293 = vunpack.c.h.b16 %v1192
          %v1294 = vunpack.c.l.b16 %v1193
          %v1295 = vunpack.c.h.b16 %v1193
          %v1296 = vunpack.c.l.b16 %v1194
          %v1297 = vunpack.c.h.b16 %v1194
          %v1298 = vunpack.c.l.b16 %v1195
          %v1299 = vunpack.c.h.b16 %v1195
          %v1300 = vunpack.c.l.b16 %v1196
          %v1301 = vunpack.c.h.b16 %v1196
          %v1302 = vunpack.c.l.b16 %v1197
          %v1303 = vunpack.c.h.b16 %v1197
          %v1304 = vunpack.c.l.b16 %v1198
          %v1305 = vunpack.c.h.b16 %v1198
          %v1306 = vunpack.c.l.b16 %v1199
          %v1307 = vunpack.c.h.b16 %v1199
          %v1308 = vpack.c.b16 %v1246, %v1244
          %v1309 = vpack.c.b16 %v1247, %v1245
          %v1310 = vpack.c.b16 %v1250, %v1248
          %v1311 = vpack.c.b16 %v1251, %v1249
          %v1312 = vpack.c.b16 %v1254, %v1252
          %v1313 = vpack.c.b16 %v1255, %v1253
          %v1314 = vpack.c.b16 %v1258, %v1256
          %v1315 = vpack.c.b16 %v1259, %v1257
          %v1316 = vpack.c.b16 %v1262, %v1260
          %v1317 = vpack.c.b16 %v1263, %v1261
          %v1318 = vpack.c.b16 %v1266, %v1264
          %v1319 = vpack.c.b16 %v1267, %v1265
          %v1320 = vpack.c.b16 %v1270, %v1268
          %v1321 = vpack.c.b16 %v1271, %v1269
          %v1322 = vpack.c.b16 %v1274, %v1272
          %v1323 = vpack.c.b16 %v1275, %v1273
          %v1324 = vpack.c.b16 %v1278, %v1276
          %v1325 = vpack.c.b16 %v1279, %v1277
          %v1326 = vpack.c.b16 %v1282, %v1280
          %v1327 = vpack.c.b16 %v1283, %v1281
          %v1328 = vpack.c.b16 %v1286, %v1284
          %v1329 = vpack.c.b16 %v1287, %v1285
          %v1330 = vpack.c.b16 %v1290, %v1288
          %v1331 = vpack.c.b16 %v1291, %v1289
          %v1332 = vpack.c.b16 %v1294, %v1292
          %v1333 = vpack.c.b16 %v1295, %v1293
          %v1334 = vpack.c.b16 %v1298, %v1296
          %v1335 = vpack.c.b16 %v1299, %v1297
          %v1336 = vpack.c.b16 %v1302, %v1300
          %v1337 = vpack.c.b16 %v1303, %v1301
          %v1338 = vpack.c.b16 %v1306, %v1304
          %v1339 = vpack.c.b16 %v1307, %v1305
          %1372 = vmatprep.subr.bf16.mxu0 %v1309
          %1373 = vmatpush1.bf16.msra.mxu0 %v1308
          %1374 = vmatprep.subr.bf16.mxu0 %v1311
          %1375 = vmatpush1.bf16.msra.mxu0 %v1310
          %1376 = vmatprep.subr.bf16.mxu0 %v1313
          %1377 = vmatpush1.bf16.msra.mxu0 %v1312
          %1378 = vmatprep.subr.bf16.mxu0 %v1315
          %1379 = vmatpush1.bf16.msra.mxu0 %v1314
          %1380 = vmatprep.subr.bf16.mxu0 %v1317
          %1381 = vmatpush1.bf16.msra.mxu0 %v1316
          %1382 = vmatprep.subr.bf16.mxu0 %v1319
          %1383 = vmatpush1.bf16.msra.mxu0 %v1318
          %1384 = vmatprep.subr.bf16.mxu0 %v1321
          %1385 = vmatpush1.bf16.msra.mxu0 %v1320
          %1386 = vmatprep.subr.bf16.mxu0 %v1323
          %1387 = vmatpush1.bf16.msra.mxu0 %v1322
          %1388 = vmatprep.subr.bf16.mxu0 %v1325
          %1389 = vmatpush1.bf16.msra.mxu0 %v1324
          %1390 = vmatprep.subr.bf16.mxu0 %v1327
          %1391 = vmatpush1.bf16.msra.mxu0 %v1326
          %1392 = vmatprep.subr.bf16.mxu0 %v1329
          %1393 = vmatpush1.bf16.msra.mxu0 %v1328
          %1394 = vmatprep.subr.bf16.mxu0 %v1331
          %1395 = vmatpush1.bf16.msra.mxu0 %v1330
          %1396 = vmatprep.subr.bf16.mxu0 %v1333
          %1397 = vmatpush1.bf16.msra.mxu0 %v1332
          %1398 = vmatprep.subr.bf16.mxu0 %v1335
          %1399 = vmatpush1.bf16.msra.mxu0 %v1334
          %1400 = vmatprep.subr.bf16.mxu0 %v1337
          %1401 = vmatpush1.bf16.msra.mxu0 %v1336
          %1402 = vmatprep.subr.bf16.mxu0 %v1339
          %1403 = vmatpush1.bf16.msra.mxu0 %v1338
          %1404 = vmatprep.mubr.bf16.mxu0 %v1165
          %1405 = vmatmul.mubr.bf16.gmra.mrb[0].mxu0 %v1164
          %v1406 = vpop.f32.mrb[0].mxu0
          %v1407 = vadd.f32 %v1205, %v1406
          %v1408 = vpop.f32.mrb[0].mxu0
          %v1409 = vadd.f32 %v1209, %v1408
          %v1410 = vpop.f32.mrb[0].mxu0
          %v1411 = vadd.f32 %v1205, %v1410
          %v1412 = vpop.f32.mrb[0].mxu0
          %v1413 = vadd.f32 %v1209, %v1412
          %1414 = vmatprep.mubr.bf16.mxu0 %v1167
          %1415 = vmatmul.mubr.bf16.gmra.mrb[0].mxu0 %v1166
          %v1416 = vpop.f32.mrb[0].mxu0
          %v1417 = vadd.f32 %v1205, %v1416
          %v1418 = vpop.f32.mrb[0].mxu0
          %v1419 = vadd.f32 %v1209, %v1418
          %v1420 = vpop.f32.mrb[0].mxu0
          %v1421 = vadd.f32 %v1205, %v1420
          %v1422 = vpop.f32.mrb[0].mxu0
          %v1423 = vadd.f32 %v1209, %v1422
          %1424 = vdwg.mxu0
          %1425 = vst [vmem:[%s382] sm:$0xff] %v1407
          %1426 = vst [vmem:[%s382 + $0x8] sm:$0xff] %v1409
          %1427 = vst [vmem:[%s382 + $0x10] sm:$0xff] %v1411
          %1428 = vst [vmem:[%s382 + $0x18] sm:$0xff] %v1413
          %1429 = vst [vmem:[%s382 + $0x20] sm:$0xff] %v1417
          %1430 = vst [vmem:[%s382 + $0x28] sm:$0xff] %v1419
          %1431 = vst [vmem:[%s382 + $0x30] sm:$0xff] %v1421
          %1432 = vst [vmem:[%s382 + $0x38] sm:$0xff] %v1423
        $region84: #{tpu_custom_call.1} parent=55 // pred_fallthru
          _
        %s1433 = sand.u32 %s247, 1
        %s1434 = scalar_lea.sflag [#allocation9], %s1433
        %s1435 = sand.u32 %s247, 1
        %s1436 = smul.addr %s1435, 64
        %s1437 = scalar_lea.vmem [#allocation12], %s1436
        // Predicated region
        $region89: #{tpu_custom_call.1} parent=55 // pred_check
          %p1438 = pneg %p257
        $region90: #{tpu_custom_call.1} parent=55 // pred_check_branch
          %1440 = sbr.rel (%p1438) target = $region92
        $region91: #{tpu_custom_call.1} parent=55 // pred_region
          %p1441 = scmp.eq.s32.totalorder %s29, 2
          %s1442 = scalar_select %p1441, %s30, 0
          %s1443 = smul.u32 4, %s1442
          %s1445 = ssub.s32 1024, 1024
          %1446 = vsyncadd %s1434, %s1445
          %s1447 = smul.addr %s1443, 2
          %s1448 = smul.addr %s1447, 128
          %s1449 = scalar_lea.hbm %s9, %s1448
          %s1450 = sshll.u32 %s1437, 4
          %s1451 = int_to_ptr.vmem [resolvable:$true] %s1450
          %1456 = dma.vmem_to_hbm [thread:$0]  %s1451, 1024, %s1449, %s1434, 256, 256, 16
        $region92: #{tpu_custom_call.1} parent=55 // pred_fallthru
          _
      $region56: #{tpu_custom_call.1} parent=5 // pred_fallthru
        _
      %p1457 = scmp.le.s32.totalorder 2, %s20
      // Predicated region
      $region93: #{tpu_custom_call.1} parent=5 // pred_check
        %p1458 = pneg %p1457
      $region94: #{tpu_custom_call.1} parent=5 // pred_check_branch
        %1460 = sbr.rel (%p1458) target = $region96
      $region95: #{tpu_custom_call.1} parent=5 // pred_region
        %s1461 = ssub.s32 %s20, 2
        // Predicated region
        $region97: #{tpu_custom_call.1} parent=95 // pred_check
          %p1462 = pneg %p263
        $region98: #{tpu_custom_call.1} parent=95 // pred_check_branch
          %1464 = sbr.rel (%p1462) target = $region100
        $region99: #{tpu_custom_call.1} parent=95 // pred_region
          %s1465 = sand.u32 %s248, 1
          %s1466 = scalar_lea.sflag [#allocation9], %s1465
          %s1467 = sand.u32 %s248, 1
          %s1468 = smul.addr %s1467, 64
          %s1469 = scalar_lea.vmem [#allocation12], %s1468
          %1470 = dma.done %s1466, 1024
        $region100: #{tpu_custom_call.1} parent=95 // pred_fallthru
          _
      $region96: #{tpu_custom_call.1} parent=5 // pred_fallthru
        _
    $region6: #{tpu_custom_call.1} parent=1 // loop_footer
      %s24 = sadd.s32 1, %s20
    $region7: #{tpu_custom_call.1} parent=1 // loop_footer_branch
      %19 = sbr.rel target = $region3
    $region8: #{tpu_custom_call.1} parent=1 // loop_exit
      _
    %1471 = vsyncpa [#allocation8], 1
    %s1472 = scalar_lea.sflag [#allocation8], 1
    %1473 = vsyncpa %s1472, 1
    %1474 = vsyncpa [#allocation11], 1
    %1475 = vsyncpa [#allocation9], 1
    %s1476 = scalar_lea.sflag [#allocation9], 1
    %1477 = vsyncpa %s1476, 1

</llo_original>
